<compile_context>
chip_gen: v5e
topology: v5e:2x2
jax: 0.10.0
libtpu: 0.0.40
codegen_flags: <defaults>
</compile_context>

<pallas_src>
import jax
import jax.numpy as jnp
from jax import lax
from jax.experimental import pallas as pl
from jax.experimental.pallas import tpu as pltpu

SEQ_LEN = 8
BATCH = 8
INPUT_SIZE = 16
HIDDEN_SIZE = 32
NUM_LAYERS = 2
LN_EPS = 1e-5


def _layer_norm_ref(h, gamma, beta):
    mean = jnp.mean(h, axis=-1, keepdims=True)
    var = jnp.mean((h - mean) ** 2, axis=-1, keepdims=True)
    return (h - mean) * lax.rsqrt(var + LN_EPS) * gamma + beta


def _layer_norm_fast(h, gamma, beta):
    # Two independent cross-lane reductions (can co-issue on the XLU) instead of
    # mean -> subtract -> square -> mean in series; single rsqrt (EUP).
    inv_h = 1.0 / HIDDEN_SIZE
    s1 = jnp.sum(h, axis=-1, keepdims=True)
    s2 = jnp.sum(h * h, axis=-1, keepdims=True)
    mean = s1 * inv_h
    var = s2 * inv_h - mean * mean
    return (h - mean) * lax.rsqrt(var + LN_EPS) * gamma + beta


def slstm_kernel(
    x_ref,       # (S*B, I)    f32   whole sequence, time-major, flattened
    wx0p_ref,    # (I, 5H)     f32   [Wx0 | Wp]  (gates + residual projection)
    rw_ref,      # (3, H, 4H)  bf16  stacked [Wh0, Wx1, Wh1]
    pp_ref,      # (6, 5H)     f32   packed [b0, b1, g0, be0, g1, be1] (zero-padded)
    out_ref,     # (S, B, H)   f32   per-timestep output (last layer h)
    hF_ref,      # (L, B, H)   f32   final hidden states
    cF_ref,      # (L, B, H)   f32   final cell states
    xg_sc,       # VMEM (S*B, 5H) f32   precomputed x @ [Wx0|Wp] + [b0|0]
):
    S, B, H = SEQ_LEN, BATCH, HIDDEN_SIZE
    G = 4 * H

    # ---- time-invariant work hoisted off the recurrence (one MXU push) ----
    pp = pp_ref[...]
    b0_row = pp[0:1, :]                                   # (1, 5H), zeros past 4H
    xg_sc[...] = (
        jnp.dot(x_ref[...], wx0p_ref[...], preferred_element_type=jnp.float32)
        + b0_row
    )

    # ---- hoisted loads / broadcasts (not re-emitted per unrolled step) ----
    wh0 = rw_ref[0]                                       # (H, 4H) bf16
    wx1 = rw_ref[1]
    wh1 = rw_ref[2]
    b1_b = jnp.broadcast_to(pp[1:2, :G], (B, G))
    g0 = jnp.broadcast_to(pp[2:3, :H], (B, H))
    be0 = jnp.broadcast_to(pp[3:4, :H], (B, H))
    g1 = jnp.broadcast_to(pp[4:5, :H], (B, H))
    be1 = jnp.broadcast_to(pp[5:6, :H], (B, H))

    zeros = jnp.zeros((B, H), jnp.float32)
    h0, c0, h1, c1 = zeros, zeros, zeros, zeros

    def lstm_update(gates, c_prev):
        # One whole-(B,4H)-vreg sigmoid + tanh (EUP), then per-gate lane slices.
        sig = jax.nn.sigmoid(gates)
        tah = jnp.tanh(gates)
        i_g = sig[:, 0 * H:1 * H]
        f_g = sig[:, 1 * H:2 * H]
        g_g = tah[:, 2 * H:3 * H]
        o_g = sig[:, 3 * H:4 * H]
        c_new = f_g * c_prev + i_g * g_g
        h_new = o_g * jnp.tanh(c_new)
        return h_new, c_new

    # S is small and static: fully unrolled time loop; h/c stay in vregs.
    for t in range(S):
        r0 = t * B
        xg = xg_sc[r0:r0 + B, :]                          # (B, 5H)

        # ----- layer 0: only the recurrent bf16 matmul is on the serial path -----
        gates0 = xg[:, :G] + jnp.dot(
            h0.astype(jnp.bfloat16), wh0, preferred_element_type=jnp.float32)
        h0n, c0 = lstm_update(gates0, c0)
        h0 = _layer_norm_fast(h0n + xg[:, G:], g0, be0)   # residual = x @ Wp

        # ----- layer 1: split matmuls (no concat); h1@Wh1 can issue early -----
        gates1 = (
            jnp.dot(h0.astype(jnp.bfloat16), wx1, preferred_element_type=jnp.float32)
            + jnp.dot(h1.astype(jnp.bfloat16), wh1, preferred_element_type=jnp.float32)
            + b1_b
        )
        h1n, c1 = lstm_update(gates1, c1)
        h1 = _layer_norm_fast(h1n + h0, g1, be1)          # residual = layer-0 h

        out_ref[t] = h1.astype(out_ref.dtype)

    # NOTE: hard-codes NUM_LAYERS == 2 (matches the module constants used here).
    hF_ref[0] = h0.astype(hF_ref.dtype)
    hF_ref[1] = h1.astype(hF_ref.dtype)
    cF_ref[0] = c0.astype(cF_ref.dtype)
    cF_ref[1] = c1.astype(cF_ref.dtype)


def _pad_cols(a, width):
    return jnp.pad(a, ((0, 0), (0, width - a.shape[-1])))


def slstm_layer_forward(x, params):
    """x: (S, B, I) f32.  Returns (output (S,B,H), (h (L,B,H), c (L,B,H)))."""
    S, B, I = x.shape
    H, L = HIDDEN_SIZE, NUM_LAYERS
    G = 4 * H

    # --- wrapper-side one-time layout prep (all outside the kernel) ---
    x_flat = x.reshape(S * B, I)
    # Hoisted-matmul RHS: [Wx0 | Wp]  -> one MXU push and one scratch buffer.
    wx0p = jnp.concatenate([params["wx0"], params["wp"]], axis=1)       # (I, 5H)
    # Serial-path recurrent weights, stacked and pre-cast to bf16.
    rec_w = jnp.stack(
        [params["wh0"], params["wx1"], params["wh1"]], axis=0
    ).astype(jnp.bfloat16)                                              # (3, H, 4H)
    # Six tiny bias / LayerNorm params packed into one (6, 5H) array.
    pp = jnp.concatenate(
        [
            _pad_cols(params["b0"], 5 * H),
            _pad_cols(params["b1"], 5 * H),
            _pad_cols(params["g0"], 5 * H),
            _pad_cols(params["be0"], 5 * H),
            _pad_cols(params["g1"], 5 * H),
            _pad_cols(params["be1"], 5 * H),
        ],
        axis=0,
    )

    flops = (
        2 * S * B * I * (5 * H)          # x @ [Wx0|Wp]   (hoisted)
        + 2 * S * B * H * G              # h0 @ Wh0       (per step)
        + 2 * S * B * H * G              # h0 @ Wx1       (per step)
        + 2 * S * B * H * G              # h1 @ Wh1       (per step)
    )
    transcendentals = S * B * (2 * (G + G + H) + 2)     # sigmoid/tanh + LN rsqrt
    bytes_accessed = (
        4 * (x_flat.size + wx0p.size + pp.size)
        + 2 * rec_w.size
        + 4 * (S * B * H + 2 * L * B * H)
    )

    vmem_spec = pl.BlockSpec(memory_space=pltpu.MemorySpace.VMEM)

    out, h_final, c_final = pl.pallas_call(
        slstm_kernel,
        out_shape=(
            jax.ShapeDtypeStruct((S, B, H), jnp.float32),
            jax.ShapeDtypeStruct((L, B, H), jnp.float32),
            jax.ShapeDtypeStruct((L, B, H), jnp.float32),
        ),
        in_specs=[vmem_spec, vmem_spec, vmem_spec, vmem_spec],
        out_specs=(vmem_spec, vmem_spec, vmem_spec),
        scratch_shapes=[
            pltpu.VMEM((S * B, 5 * H), jnp.float32),
        ],
        cost_estimate=pl.CostEstimate(
            flops=flops,
            transcendentals=transcendentals,
            bytes_accessed=bytes_accessed,
        ),
    )(x_flat, wx0p, rec_w, pp)
    return out, (h_final, c_final)


def slstm_layer_reference(x, params):
    """Pure-JAX f32 reference matching the PyTorch forward semantics."""
    S, B, I = x.shape
    H = HIDDEN_SIZE
    L = NUM_LAYERS
    h = [jnp.zeros((B, H), jnp.float32) for _ in range(L)]
    c = [jnp.zeros((B, H), jnp.float32) for _ in range(L)]
    wx = [params["wx0"], params["wx1"]]
    wh = [params["wh0"], params["wh1"]]
    bb = [params["b0"], params["b1"]]
    gg = [params["g0"], params["g1"]]
    be = [params["be0"], params["be1"]]
    outs = []
    for t in range(S):
        layer_input = x[t]
        for layer in range(L):
            gates = layer_input @ wx[layer] + h[layer] @ wh[layer] + bb[layer]
            i_g = jax.nn.sigmoid(gates[:, 0 * H:1 * H])
            f_g = jax.nn.sigmoid(gates[:, 1 * H:2 * H])
            g_g = jnp.tanh(gates[:, 2 * H:3 * H])
            o_g = jax.nn.sigmoid(gates[:, 3 * H:4 * H])
            c[layer] = f_g * c[layer] + i_g * g_g
            h_new = o_g * jnp.tanh(c[layer])
            if layer == 0:
                residual = layer_input @ params["wp"]
            else:
                residual = layer_input
            h_new = h_new + residual
            h[layer] = _layer_norm_ref(h_new, gg[layer], be[layer])
            layer_input = h[layer]
        outs.append(h[-1])
    return jnp.stack(outs), (jnp.stack(h), jnp.stack(c))


def init_params(key):
    H, I = HIDDEN_SIZE, INPUT_SIZE
    ks = jax.random.split(key, 8)
    scale = 0.1
    params = {
        "wp": scale * jax.random.normal(ks[0], (I, H), jnp.float32),
        "wx0": scale * jax.random.normal(ks[1], (I, 4 * H), jnp.float32),
        "wh0": scale * jax.random.normal(ks[2], (H, 4 * H), jnp.float32),
        "b0": scale * jax.random.normal(ks[3], (1, 4 * H), jnp.float32),
        "wx1": scale * jax.random.normal(ks[4], (H, 4 * H), jnp.float32),
        "wh1": scale * jax.random.normal(ks[5], (H, 4 * H), jnp.float32),
        "b1": scale * jax.random.normal(ks[6], (1, 4 * H), jnp.float32),
        "g0": jnp.ones((1, H), jnp.float32),
        "be0": jnp.zeros((1, H), jnp.float32),
        "g1": jnp.ones((1, H), jnp.float32),
        "be1": jnp.zeros((1, H), jnp.float32),
    }
    return params


if __name__ == "__main__":
    key = jax.random.PRNGKey(0)
    k_x, k_p = jax.random.split(key)
    x = jax.random.normal(k_x, (SEQ_LEN, BATCH, INPUT_SIZE), jnp.float32)
    params = init_params(k_p)

    out, (h_f, c_f) = jax.jit(slstm_layer_forward)(x, params)
    jax.block_until_ready((out, h_f, c_f))

    out_ref, (h_ref, c_ref) = slstm_layer_reference(x, params)
    # bf16 recurrent-path operands -> tolerance relaxed vs. the pure-f32 reference.
    assert jnp.allclose(out, out_ref, atol=5e-2, rtol=5e-2), "output mismatch"
    assert jnp.allclose(h_f, h_ref, atol=5e-2, rtol=5e-2), "h mismatch"
    assert jnp.allclose(c_f, c_ref, atol=5e-2, rtol=5e-2), "c mismatch"

    print("KERNEL_OK")
</pallas_src>

<mosaic_0001>
module attributes {stable_mosaic.version = 11 : i64} {
  func.func @slstm_kernel(%arg0: memref<64x16xf32, #tpu.memory_space<vmem>>, %arg1: memref<16x160xf32, #tpu.memory_space<vmem>>, %arg2: memref<3x32x128xbf16, #tpu.memory_space<vmem>>, %arg3: memref<6x160xf32, #tpu.memory_space<vmem>>, %arg4: memref<8x8x32xf32, #tpu.memory_space<vmem>>, %arg5: memref<2x8x32xf32, #tpu.memory_space<vmem>>, %arg6: memref<2x8x32xf32, #tpu.memory_space<vmem>>, %arg7: memref<64x160xf32, #tpu.memory_space<vmem>>) attributes {dimension_semantics = [], scalar_prefetch = 0 : i64, scratch_operands = 1 : i64, tpu.core_type = #tpu.core_type<tc>} {
    %c0 = arith.constant 0 : index
    %c0_0 = arith.constant 0 : index
    %0 = vector.load %arg3[%c0, %c0_0] : memref<6x160xf32, #tpu.memory_space<vmem>>, vector<6x160xf32>
    %1 = vector.extract_strided_slice %0 {offsets = [0, 0], sizes = [1, 160], strides = [1, 1]} : vector<6x160xf32> to vector<1x160xf32>
    %c0_1 = arith.constant 0 : index
    %c0_2 = arith.constant 0 : index
    %2 = vector.load %arg0[%c0_1, %c0_2] : memref<64x16xf32, #tpu.memory_space<vmem>>, vector<64x16xf32>
    %c0_3 = arith.constant 0 : index
    %c0_4 = arith.constant 0 : index
    %3 = vector.load %arg1[%c0_3, %c0_4] : memref<16x160xf32, #tpu.memory_space<vmem>>, vector<16x160xf32>
    %cst = arith.constant dense<0.000000e+00> : vector<64x160xf32>
    %4 = tpu.matmul %2, %3, %cst {dimension_numbers = #tpu.dot_dimension_numbers<[1], [0], [0], [1], [0, 0, 1, 1], [], []>} : vector<64x16xf32>, vector<16x160xf32>, vector<64x160xf32> -> vector<64x160xf32>
    %5 = vector.broadcast %1 : vector<1x160xf32> to vector<64x160xf32>
    %6 = arith.addf %4, %5 : vector<64x160xf32>
    %c0_5 = arith.constant 0 : index
    %c0_6 = arith.constant 0 : index
    %7 = vector.load %arg7[%c0_5, %c0_6] : memref<64x160xf32, #tpu.memory_space<vmem>>, vector<64x160xf32>
    tpu.vector_store %arg7[%c0_5, %c0_6], %6 {strides = array<i32>} : memref<64x160xf32, #tpu.memory_space<vmem>>, vector<64x160xf32>,
    %c0_7 = arith.constant 0 : index
    %c0_8 = arith.constant 0 : index
    %c0_9 = arith.constant 0 : index
    %8 = vector.load %arg2[%c0_7, %c0_8, %c0_9] : memref<3x32x128xbf16, #tpu.memory_space<vmem>>, vector<1x32x128xbf16>
    %9 = vector.shape_cast %8 : vector<1x32x128xbf16> to vector<32x128xbf16>
    %c1 = arith.constant 1 : index
    %c0_10 = arith.constant 0 : index
    %c0_11 = arith.constant 0 : index
    %10 = vector.load %arg2[%c1, %c0_10, %c0_11] : memref<3x32x128xbf16, #tpu.memory_space<vmem>>, vector<1x32x128xbf16>
    %11 = vector.shape_cast %10 : vector<1x32x128xbf16> to vector<32x128xbf16>
    %c2 = arith.constant 2 : index
    %c0_12 = arith.constant 0 : index
    %c0_13 = arith.constant 0 : index
    %12 = vector.load %arg2[%c2, %c0_12, %c0_13] : memref<3x32x128xbf16, #tpu.memory_space<vmem>>, vector<1x32x128xbf16>
    %13 = vector.shape_cast %12 : vector<1x32x128xbf16> to vector<32x128xbf16>
    %14 = vector.extract_strided_slice %0 {offsets = [1, 0], sizes = [1, 128], strides = [1, 1]} : vector<6x160xf32> to vector<1x128xf32>
    %15 = vector.shape_cast %14 : vector<1x128xf32> to vector<1x128xf32>
    %16 = vector.broadcast %15 : vector<1x128xf32> to vector<8x128xf32>
    %17 = vector.extract_strided_slice %0 {offsets = [2, 0], sizes = [1, 32], strides = [1, 1]} : vector<6x160xf32> to vector<1x32xf32>
    %18 = vector.shape_cast %17 : vector<1x32xf32> to vector<1x32xf32>
    %19 = vector.broadcast %18 : vector<1x32xf32> to vector<8x32xf32>
    %20 = vector.extract_strided_slice %0 {offsets = [3, 0], sizes = [1, 32], strides = [1, 1]} : vector<6x160xf32> to vector<1x32xf32>
    %21 = vector.shape_cast %20 : vector<1x32xf32> to vector<1x32xf32>
    %22 = vector.broadcast %21 : vector<1x32xf32> to vector<8x32xf32>
    %23 = vector.extract_strided_slice %0 {offsets = [4, 0], sizes = [1, 32], strides = [1, 1]} : vector<6x160xf32> to vector<1x32xf32>
    %24 = vector.shape_cast %23 : vector<1x32xf32> to vector<1x32xf32>
    %25 = vector.broadcast %24 : vector<1x32xf32> to vector<8x32xf32>
    %26 = vector.extract_strided_slice %0 {offsets = [5, 0], sizes = [1, 32], strides = [1, 1]} : vector<6x160xf32> to vector<1x32xf32>
    %27 = vector.shape_cast %26 : vector<1x32xf32> to vector<1x32xf32>
    %28 = vector.broadcast %27 : vector<1x32xf32> to vector<8x32xf32>
    %cst_14 = arith.constant 0.000000e+00 : f32
    %29 = vector.broadcast %cst_14 : f32 to vector<8x32xf32>
    %c0_15 = arith.constant 0 : index
    %c0_16 = arith.constant 0 : index
    %30 = vector.load %arg7[%c0_15, %c0_16] : memref<64x160xf32, #tpu.memory_space<vmem>>, vector<8x160xf32>
    %31 = vector.extract_strided_slice %30 {offsets = [0, 0], sizes = [8, 128], strides = [1, 1]} : vector<8x160xf32> to vector<8x128xf32>
    %32 = arith.truncf %29 : vector<8x32xf32> to vector<8x32xbf16>
    %cst_17 = arith.constant dense<0.000000e+00> : vector<8x128xf32>
    %33 = tpu.matmul %32, %9, %cst_17 {dimension_numbers = #tpu.dot_dimension_numbers<[1], [0], [0], [1], [0, 0, 1, 1], [], []>} : vector<8x32xbf16>, vector<32x128xbf16>, vector<8x128xf32> -> vector<8x128xf32>
    %34 = arith.addf %31, %33 : vector<8x128xf32>
    %35 = arith.negf %34 : vector<8x128xf32>
    %36 = math.exp %35 : vector<8x128xf32>
    %cst_18 = arith.constant 1.000000e+00 : f32
    %37 = vector.broadcast %cst_18 : f32 to vector<8x128xf32>
    %38 = arith.addf %37, %36 : vector<8x128xf32>
    %39 = arith.divf %37, %38 : vector<8x128xf32>
    %40 = math.tanh %34 : vector<8x128xf32>
    %41 = vector.extract_strided_slice %39 {offsets = [0, 0], sizes = [8, 32], strides = [1, 1]} : vector<8x128xf32> to vector<8x32xf32>
    %42 = vector.extract_strided_slice %39 {offsets = [0, 32], sizes = [8, 32], strides = [1, 1]} : vector<8x128xf32> to vector<8x32xf32>
    %43 = vector.extract_strided_slice %40 {offsets = [0, 64], sizes = [8, 32], strides = [1, 1]} : vector<8x128xf32> to vector<8x32xf32>
    %44 = vector.extract_strided_slice %39 {offsets = [0, 96], sizes = [8, 32], strides = [1, 1]} : vector<8x128xf32> to vector<8x32xf32>
    %45 = arith.mulf %42, %29 : vector<8x32xf32>
    %46 = arith.mulf %41, %43 : vector<8x32xf32>
    %47 = arith.addf %45, %46 : vector<8x32xf32>
    %48 = math.tanh %47 : vector<8x32xf32>
    %49 = arith.mulf %44, %48 : vector<8x32xf32>
    %50 = vector.extract_strided_slice %30 {offsets = [0, 128], sizes = [8, 32], strides = [1, 1]} : vector<8x160xf32> to vector<8x32xf32>
    %51 = arith.addf %49, %50 : vector<8x32xf32>
    %cst_19 = arith.constant dense<0.000000e+00> : vector<8xf32>
    %52 = vector.multi_reduction <add>, %51, %cst_19 [1] : vector<8x32xf32> to vector<8xf32>
    %53 = vector.shape_cast %52 : vector<8xf32> to vector<8x1xf32>
    %54 = arith.mulf %51, %51 : vector<8x32xf32>
    %cst_20 = arith.constant dense<0.000000e+00> : vector<8xf32>
    %55 = vector.multi_reduction <add>, %54, %cst_20 [1] : vector<8x32xf32> to vector<8xf32>
    %56 = vector.shape_cast %55 : vector<8xf32> to vector<8x1xf32>
    %cst_21 = arith.constant 3.125000e-02 : f32
    %57 = vector.broadcast %cst_21 : f32 to vector<8x1xf32>
    %58 = arith.mulf %53, %57 : vector<8x1xf32>
    %cst_22 = arith.constant 3.125000e-02 : f32
    %59 = vector.broadcast %cst_22 : f32 to vector<8x1xf32>
    %60 = arith.mulf %56, %59 : vector<8x1xf32>
    %61 = arith.mulf %58, %58 : vector<8x1xf32>
    %62 = arith.subf %60, %61 : vector<8x1xf32>
    %63 = vector.broadcast %58 : vector<8x1xf32> to vector<8x32xf32>
    %64 = arith.subf %51, %63 : vector<8x32xf32>
    %cst_23 = arith.constant 9.99999974E-6 : f32
    %65 = vector.broadcast %cst_23 : f32 to vector<8x1xf32>
    %66 = arith.addf %62, %65 : vector<8x1xf32>
    %67 = math.rsqrt %66 : vector<8x1xf32>
    %68 = vector.broadcast %67 : vector<8x1xf32> to vector<8x32xf32>
    %69 = arith.mulf %64, %68 : vector<8x32xf32>
    %70 = arith.mulf %69, %19 : vector<8x32xf32>
    %71 = arith.addf %70, %22 : vector<8x32xf32>
    %72 = arith.truncf %71 : vector<8x32xf32> to vector<8x32xbf16>
    %cst_24 = arith.constant dense<0.000000e+00> : vector<8x128xf32>
    %73 = tpu.matmul %72, %11, %cst_24 {dimension_numbers = #tpu.dot_dimension_numbers<[1], [0], [0], [1], [0, 0, 1, 1], [], []>} : vector<8x32xbf16>, vector<32x128xbf16>, vector<8x128xf32> -> vector<8x128xf32>
    %74 = arith.truncf %29 : vector<8x32xf32> to vector<8x32xbf16>
    %cst_25 = arith.constant dense<0.000000e+00> : vector<8x128xf32>
    %75 = tpu.matmul %74, %13, %cst_25 {dimension_numbers = #tpu.dot_dimension_numbers<[1], [0], [0], [1], [0, 0, 1, 1], [], []>} : vector<8x32xbf16>, vector<32x128xbf16>, vector<8x128xf32> -> vector<8x128xf32>
    %76 = arith.addf %73, %75 : vector<8x128xf32>
    %77 = arith.addf %76, %16 : vector<8x128xf32>
    %78 = arith.negf %77 : vector<8x128xf32>
    %79 = math.exp %78 : vector<8x128xf32>
    %cst_26 = arith.constant 1.000000e+00 : f32
    %80 = vector.broadcast %cst_26 : f32 to vector<8x128xf32>
    %81 = arith.addf %80, %79 : vector<8x128xf32>
    %82 = arith.divf %80, %81 : vector<8x128xf32>
    %83 = math.tanh %77 : vector<8x128xf32>
    %84 = vector.extract_strided_slice %82 {offsets = [0, 0], sizes = [8, 32], strides = [1, 1]} : vector<8x128xf32> to vector<8x32xf32>
    %85 = vector.extract_strided_slice %82 {offsets = [0, 32], sizes = [8, 32], strides = [1, 1]} : vector<8x128xf32> to vector<8x32xf32>
    %86 = vector.extract_strided_slice %83 {offsets = [0, 64], sizes = [8, 32], strides = [1, 1]} : vector<8x128xf32> to vector<8x32xf32>
    %87 = vector.extract_strided_slice %82 {offsets = [0, 96], sizes = [8, 32], strides = [1, 1]} : vector<8x128xf32> to vector<8x32xf32>
    %88 = arith.mulf %85, %29 : vector<8x32xf32>
    %89 = arith.mulf %84, %86 : vector<8x32xf32>
    %90 = arith.addf %88, %89 : vector<8x32xf32>
    %91 = math.tanh %90 : vector<8x32xf32>
    %92 = arith.mulf %87, %91 : vector<8x32xf32>
    %93 = arith.addf %92, %71 : vector<8x32xf32>
    %cst_27 = arith.constant dense<0.000000e+00> : vector<8xf32>
    %94 = vector.multi_reduction <add>, %93, %cst_27 [1] : vector<8x32xf32> to vector<8xf32>
    %95 = vector.shape_cast %94 : vector<8xf32> to vector<8x1xf32>
    %96 = arith.mulf %93, %93 : vector<8x32xf32>
    %cst_28 = arith.constant dense<0.000000e+00> : vector<8xf32>
    %97 = vector.multi_reduction <add>, %96, %cst_28 [1] : vector<8x32xf32> to vector<8xf32>
    %98 = vector.shape_cast %97 : vector<8xf32> to vector<8x1xf32>
    %cst_29 = arith.constant 3.125000e-02 : f32
    %99 = vector.broadcast %cst_29 : f32 to vector<8x1xf32>
    %100 = arith.mulf %95, %99 : vector<8x1xf32>
    %cst_30 = arith.constant 3.125000e-02 : f32
    %101 = vector.broadcast %cst_30 : f32 to vector<8x1xf32>
    %102 = arith.mulf %98, %101 : vector<8x1xf32>
    %103 = arith.mulf %100, %100 : vector<8x1xf32>
    %104 = arith.subf %102, %103 : vector<8x1xf32>
    %105 = vector.broadcast %100 : vector<8x1xf32> to vector<8x32xf32>
    %106 = arith.subf %93, %105 : vector<8x32xf32>
    %cst_31 = arith.constant 9.99999974E-6 : f32
    %107 = vector.broadcast %cst_31 : f32 to vector<8x1xf32>
    %108 = arith.addf %104, %107 : vector<8x1xf32>
    %109 = math.rsqrt %108 : vector<8x1xf32>
    %110 = vector.broadcast %109 : vector<8x1xf32> to vector<8x32xf32>
    %111 = arith.mulf %106, %110 : vector<8x32xf32>
    %112 = arith.mulf %111, %25 : vector<8x32xf32>
    %113 = arith.addf %112, %28 : vector<8x32xf32>
    %c0_32 = arith.constant 0 : index
    %c0_33 = arith.constant 0 : index
    %c0_34 = arith.constant 0 : index
    %114 = vector.load %arg4[%c0_32, %c0_33, %c0_34] : memref<8x8x32xf32, #tpu.memory_space<vmem>>, vector<1x8x32xf32>
    %115 = vector.shape_cast %114 : vector<1x8x32xf32> to vector<8x32xf32>
    %116 = vector.shape_cast %113 : vector<8x32xf32> to vector<1x8x32xf32>
    tpu.vector_store %arg4[%c0_32, %c0_33, %c0_34], %116 {strides = array<i32>} : memref<8x8x32xf32, #tpu.memory_space<vmem>>, vector<1x8x32xf32>,
    %c8 = arith.constant 8 : index
    %c0_35 = arith.constant 0 : index
    %117 = vector.load %arg7[%c8, %c0_35] : memref<64x160xf32, #tpu.memory_space<vmem>>, vector<8x160xf32>
    %118 = vector.extract_strided_slice %117 {offsets = [0, 0], sizes = [8, 128], strides = [1, 1]} : vector<8x160xf32> to vector<8x128xf32>
    %119 = arith.truncf %71 : vector<8x32xf32> to vector<8x32xbf16>
    %cst_36 = arith.constant dense<0.000000e+00> : vector<8x128xf32>
    %120 = tpu.matmul %119, %9, %cst_36 {dimension_numbers = #tpu.dot_dimension_numbers<[1], [0], [0], [1], [0, 0, 1, 1], [], []>} : vector<8x32xbf16>, vector<32x128xbf16>, vector<8x128xf32> -> vector<8x128xf32>
    %121 = arith.addf %118, %120 : vector<8x128xf32>
    %122 = arith.negf %121 : vector<8x128xf32>
    %123 = math.exp %122 : vector<8x128xf32>
    %cst_37 = arith.constant 1.000000e+00 : f32
    %124 = vector.broadcast %cst_37 : f32 to vector<8x128xf32>
    %125 = arith.addf %124, %123 : vector<8x128xf32>
    %126 = arith.divf %124, %125 : vector<8x128xf32>
    %127 = math.tanh %121 : vector<8x128xf32>
    %128 = vector.extract_strided_slice %126 {offsets = [0, 0], sizes = [8, 32], strides = [1, 1]} : vector<8x128xf32> to vector<8x32xf32>
    %129 = vector.extract_strided_slice %126 {offsets = [0, 32], sizes = [8, 32], strides = [1, 1]} : vector<8x128xf32> to vector<8x32xf32>
    %130 = vector.extract_strided_slice %127 {offsets = [0, 64], sizes = [8, 32], strides = [1, 1]} : vector<8x128xf32> to vector<8x32xf32>
    %131 = vector.extract_strided_slice %126 {offsets = [0, 96], sizes = [8, 32], strides = [1, 1]} : vector<8x128xf32> to vector<8x32xf32>
    %132 = arith.mulf %129, %47 : vector<8x32xf32>
    %133 = arith.mulf %128, %130 : vector<8x32xf32>
    %134 = arith.addf %132, %133 : vector<8x32xf32>
    %135 = math.tanh %134 : vector<8x32xf32>
    %136 = arith.mulf %131, %135 : vector<8x32xf32>
    %137 = vector.extract_strided_slice %117 {offsets = [0, 128], sizes = [8, 32], strides = [1, 1]} : vector<8x160xf32> to vector<8x32xf32>
    %138 = arith.addf %136, %137 : vector<8x32xf32>
    %cst_38 = arith.constant dense<0.000000e+00> : vector<8xf32>
    %139 = vector.multi_reduction <add>, %138, %cst_38 [1] : vector<8x32xf32> to vector<8xf32>
    %140 = vector.shape_cast %139 : vector<8xf32> to vector<8x1xf32>
    %141 = arith.mulf %138, %138 : vector<8x32xf32>
    %cst_39 = arith.constant dense<0.000000e+00> : vector<8xf32>
    %142 = vector.multi_reduction <add>, %141, %cst_39 [1] : vector<8x32xf32> to vector<8xf32>
    %143 = vector.shape_cast %142 : vector<8xf32> to vector<8x1xf32>
    %cst_40 = arith.constant 3.125000e-02 : f32
    %144 = vector.broadcast %cst_40 : f32 to vector<8x1xf32>
    %145 = arith.mulf %140, %144 : vector<8x1xf32>
    %cst_41 = arith.constant 3.125000e-02 : f32
    %146 = vector.broadcast %cst_41 : f32 to vector<8x1xf32>
    %147 = arith.mulf %143, %146 : vector<8x1xf32>
    %148 = arith.mulf %145, %145 : vector<8x1xf32>
    %149 = arith.subf %147, %148 : vector<8x1xf32>
    %150 = vector.broadcast %145 : vector<8x1xf32> to vector<8x32xf32>
    %151 = arith.subf %138, %150 : vector<8x32xf32>
    %cst_42 = arith.constant 9.99999974E-6 : f32
    %152 = vector.broadcast %cst_42 : f32 to vector<8x1xf32>
    %153 = arith.addf %149, %152 : vector<8x1xf32>
    %154 = math.rsqrt %153 : vector<8x1xf32>
    %155 = vector.broadcast %154 : vector<8x1xf32> to vector<8x32xf32>
    %156 = arith.mulf %151, %155 : vector<8x32xf32>
    %157 = arith.mulf %156, %19 : vector<8x32xf32>
    %158 = arith.addf %157, %22 : vector<8x32xf32>
    %159 = arith.truncf %158 : vector<8x32xf32> to vector<8x32xbf16>
    %cst_43 = arith.constant dense<0.000000e+00> : vector<8x128xf32>
    %160 = tpu.matmul %159, %11, %cst_43 {dimension_numbers = #tpu.dot_dimension_numbers<[1], [0], [0], [1], [0, 0, 1, 1], [], []>} : vector<8x32xbf16>, vector<32x128xbf16>, vector<8x128xf32> -> vector<8x128xf32>
    %161 = arith.truncf %113 : vector<8x32xf32> to vector<8x32xbf16>
    %cst_44 = arith.constant dense<0.000000e+00> : vector<8x128xf32>
    %162 = tpu.matmul %161, %13, %cst_44 {dimension_numbers = #tpu.dot_dimension_numbers<[1], [0], [0], [1], [0, 0, 1, 1], [], []>} : vector<8x32xbf16>, vector<32x128xbf16>, vector<8x128xf32> -> vector<8x128xf32>
    %163 = arith.addf %160, %162 : vector<8x128xf32>
    %164 = arith.addf %163, %16 : vector<8x128xf32>
    %165 = arith.negf %164 : vector<8x128xf32>
    %166 = math.exp %165 : vector<8x128xf32>
    %cst_45 = arith.constant 1.000000e+00 : f32
    %167 = vector.broadcast %cst_45 : f32 to vector<8x128xf32>
    %168 = arith.addf %167, %166 : vector<8x128xf32>
    %169 = arith.divf %167, %168 : vector<8x128xf32>
    %170 = math.tanh %164 : vector<8x128xf32>
    %171 = vector.extract_strided_slice %169 {offsets = [0, 0], sizes = [8, 32], strides = [1, 1]} : vector<8x128xf32> to vector<8x32xf32>
    %172 = vector.extract_strided_slice %169 {offsets = [0, 32], sizes = [8, 32], strides = [1, 1]} : vector<8x128xf32> to vector<8x32xf32>
    %173 = vector.extract_strided_slice %170 {offsets = [0, 64], sizes = [8, 32], strides = [1, 1]} : vector<8x128xf32> to vector<8x32xf32>
    %174 = vector.extract_strided_slice %169 {offsets = [0, 96], sizes = [8, 32], strides = [1, 1]} : vector<8x128xf32> to vector<8x32xf32>
    %175 = arith.mulf %172, %90 : vector<8x32xf32>
    %176 = arith.mulf %171, %173 : vector<8x32xf32>
    %177 = arith.addf %175, %176 : vector<8x32xf32>
    %178 = math.tanh %177 : vector<8x32xf32>
    %179 = arith.mulf %174, %178 : vector<8x32xf32>
    %180 = arith.addf %179, %158 : vector<8x32xf32>
    %cst_46 = arith.constant dense<0.000000e+00> : vector<8xf32>
    %181 = vector.multi_reduction <add>, %180, %cst_46 [1] : vector<8x32xf32> to vector<8xf32>
    %182 = vector.shape_cast %181 : vector<8xf32> to vector<8x1xf32>
    %183 = arith.mulf %180, %180 : vector<8x32xf32>
    %cst_47 = arith.constant dense<0.000000e+00> : vector<8xf32>
    %184 = vector.multi_reduction <add>, %183, %cst_47 [1] : vector<8x32xf32> to vector<8xf32>
    %185 = vector.shape_cast %184 : vector<8xf32> to vector<8x1xf32>
    %cst_48 = arith.constant 3.125000e-02 : f32
    %186 = vector.broadcast %cst_48 : f32 to vector<8x1xf32>
    %187 = arith.mulf %182, %186 : vector<8x1xf32>
    %cst_49 = arith.constant 3.125000e-02 : f32
    %188 = vector.broadcast %cst_49 : f32 to vector<8x1xf32>
    %189 = arith.mulf %185, %188 : vector<8x1xf32>
    %190 = arith.mulf %187, %187 : vector<8x1xf32>
    %191 = arith.subf %189, %190 : vector<8x1xf32>
    %192 = vector.broadcast %187 : vector<8x1xf32> to vector<8x32xf32>
    %193 = arith.subf %180, %192 : vector<8x32xf32>
    %cst_50 = arith.constant 9.99999974E-6 : f32
    %194 = vector.broadcast %cst_50 : f32 to vector<8x1xf32>
    %195 = arith.addf %191, %194 : vector<8x1xf32>
    %196 = math.rsqrt %195 : vector<8x1xf32>
    %197 = vector.broadcast %196 : vector<8x1xf32> to vector<8x32xf32>
    %198 = arith.mulf %193, %197 : vector<8x32xf32>
    %199 = arith.mulf %198, %25 : vector<8x32xf32>
    %200 = arith.addf %199, %28 : vector<8x32xf32>
    %c1_51 = arith.constant 1 : index
    %c0_52 = arith.constant 0 : index
    %c0_53 = arith.constant 0 : index
    %201 = vector.load %arg4[%c1_51, %c0_52, %c0_53] : memref<8x8x32xf32, #tpu.memory_space<vmem>>, vector<1x8x32xf32>
    %202 = vector.shape_cast %201 : vector<1x8x32xf32> to vector<8x32xf32>
    %203 = vector.shape_cast %200 : vector<8x32xf32> to vector<1x8x32xf32>
    tpu.vector_store %arg4[%c1_51, %c0_52, %c0_53], %203 {strides = array<i32>} : memref<8x8x32xf32, #tpu.memory_space<vmem>>, vector<1x8x32xf32>,
    %c16 = arith.constant 16 : index
    %c0_54 = arith.constant 0 : index
    %204 = vector.load %arg7[%c16, %c0_54] : memref<64x160xf32, #tpu.memory_space<vmem>>, vector<8x160xf32>
    %205 = vector.extract_strided_slice %204 {offsets = [0, 0], sizes = [8, 128], strides = [1, 1]} : vector<8x160xf32> to vector<8x128xf32>
    %206 = arith.truncf %158 : vector<8x32xf32> to vector<8x32xbf16>
    %cst_55 = arith.constant dense<0.000000e+00> : vector<8x128xf32>
    %207 = tpu.matmul %206, %9, %cst_55 {dimension_numbers = #tpu.dot_dimension_numbers<[1], [0], [0], [1], [0, 0, 1, 1], [], []>} : vector<8x32xbf16>, vector<32x128xbf16>, vector<8x128xf32> -> vector<8x128xf32>
    %208 = arith.addf %205, %207 : vector<8x128xf32>
    %209 = arith.negf %208 : vector<8x128xf32>
    %210 = math.exp %209 : vector<8x128xf32>
    %cst_56 = arith.constant 1.000000e+00 : f32
    %211 = vector.broadcast %cst_56 : f32 to vector<8x128xf32>
    %212 = arith.addf %211, %210 : vector<8x128xf32>
    %213 = arith.divf %211, %212 : vector<8x128xf32>
    %214 = math.tanh %208 : vector<8x128xf32>
    %215 = vector.extract_strided_slice %213 {offsets = [0, 0], sizes = [8, 32], strides = [1, 1]} : vector<8x128xf32> to vector<8x32xf32>
    %216 = vector.extract_strided_slice %213 {offsets = [0, 32], sizes = [8, 32], strides = [1, 1]} : vector<8x128xf32> to vector<8x32xf32>
    %217 = vector.extract_strided_slice %214 {offsets = [0, 64], sizes = [8, 32], strides = [1, 1]} : vector<8x128xf32> to vector<8x32xf32>
    %218 = vector.extract_strided_slice %213 {offsets = [0, 96], sizes = [8, 32], strides = [1, 1]} : vector<8x128xf32> to vector<8x32xf32>
    %219 = arith.mulf %216, %134 : vector<8x32xf32>
    %220 = arith.mulf %215, %217 : vector<8x32xf32>
    %221 = arith.addf %219, %220 : vector<8x32xf32>
    %222 = math.tanh %221 : vector<8x32xf32>
    %223 = arith.mulf %218, %222 : vector<8x32xf32>
    %224 = vector.extract_strided_slice %204 {offsets = [0, 128], sizes = [8, 32], strides = [1, 1]} : vector<8x160xf32> to vector<8x32xf32>
    %225 = arith.addf %223, %224 : vector<8x32xf32>
    %cst_57 = arith.constant dense<0.000000e+00> : vector<8xf32>
    %226 = vector.multi_reduction <add>, %225, %cst_57 [1] : vector<8x32xf32> to vector<8xf32>
    %227 = vector.shape_cast %226 : vector<8xf32> to vector<8x1xf32>
    %228 = arith.mulf %225, %225 : vector<8x32xf32>
    %cst_58 = arith.constant dense<0.000000e+00> : vector<8xf32>
    %229 = vector.multi_reduction <add>, %228, %cst_58 [1] : vector<8x32xf32> to vector<8xf32>
    %230 = vector.shape_cast %229 : vector<8xf32> to vector<8x1xf32>
    %cst_59 = arith.constant 3.125000e-02 : f32
    %231 = vector.broadcast %cst_59 : f32 to vector<8x1xf32>
    %232 = arith.mulf %227, %231 : vector<8x1xf32>
    %cst_60 = arith.constant 3.125000e-02 : f32
    %233 = vector.broadcast %cst_60 : f32 to vector<8x1xf32>
    %234 = arith.mulf %230, %233 : vector<8x1xf32>
    %235 = arith.mulf %232, %232 : vector<8x1xf32>
    %236 = arith.subf %234, %235 : vector<8x1xf32>
    %237 = vector.broadcast %232 : vector<8x1xf32> to vector<8x32xf32>
    %238 = arith.subf %225, %237 : vector<8x32xf32>
    %cst_61 = arith.constant 9.99999974E-6 : f32
    %239 = vector.broadcast %cst_61 : f32 to vector<8x1xf32>
    %240 = arith.addf %236, %239 : vector<8x1xf32>
    %241 = math.rsqrt %240 : vector<8x1xf32>
    %242 = vector.broadcast %241 : vector<8x1xf32> to vector<8x32xf32>
    %243 = arith.mulf %238, %242 : vector<8x32xf32>
    %244 = arith.mulf %243, %19 : vector<8x32xf32>
    %245 = arith.addf %244, %22 : vector<8x32xf32>
    %246 = arith.truncf %245 : vector<8x32xf32> to vector<8x32xbf16>
    %cst_62 = arith.constant dense<0.000000e+00> : vector<8x128xf32>
    %247 = tpu.matmul %246, %11, %cst_62 {dimension_numbers = #tpu.dot_dimension_numbers<[1], [0], [0], [1], [0, 0, 1, 1], [], []>} : vector<8x32xbf16>, vector<32x128xbf16>, vector<8x128xf32> -> vector<8x128xf32>
    %248 = arith.truncf %200 : vector<8x32xf32> to vector<8x32xbf16>
    %cst_63 = arith.constant dense<0.000000e+00> : vector<8x128xf32>
    %249 = tpu.matmul %248, %13, %cst_63 {dimension_numbers = #tpu.dot_dimension_numbers<[1], [0], [0], [1], [0, 0, 1, 1], [], []>} : vector<8x32xbf16>, vector<32x128xbf16>, vector<8x128xf32> -> vector<8x128xf32>
    %250 = arith.addf %247, %249 : vector<8x128xf32>
    %251 = arith.addf %250, %16 : vector<8x128xf32>
    %252 = arith.negf %251 : vector<8x128xf32>
    %253 = math.exp %252 : vector<8x128xf32>
    %cst_64 = arith.constant 1.000000e+00 : f32
    %254 = vector.broadcast %cst_64 : f32 to vector<8x128xf32>
    %255 = arith.addf %254, %253 : vector<8x128xf32>
    %256 = arith.divf %254, %255 : vector<8x128xf32>
    %257 = math.tanh %251 : vector<8x128xf32>
    %258 = vector.extract_strided_slice %256 {offsets = [0, 0], sizes = [8, 32], strides = [1, 1]} : vector<8x128xf32> to vector<8x32xf32>
    %259 = vector.extract_strided_slice %256 {offsets = [0, 32], sizes = [8, 32], strides = [1, 1]} : vector<8x128xf32> to vector<8x32xf32>
    %260 = vector.extract_strided_slice %257 {offsets = [0, 64], sizes = [8, 32], strides = [1, 1]} : vector<8x128xf32> to vector<8x32xf32>
    %261 = vector.extract_strided_slice %256 {offsets = [0, 96], sizes = [8, 32], strides = [1, 1]} : vector<8x128xf32> to vector<8x32xf32>
    %262 = arith.mulf %259, %177 : vector<8x32xf32>
    %263 = arith.mulf %258, %260 : vector<8x32xf32>
    %264 = arith.addf %262, %263 : vector<8x32xf32>
    %265 = math.tanh %264 : vector<8x32xf32>
    %266 = arith.mulf %261, %265 : vector<8x32xf32>
    %267 = arith.addf %266, %245 : vector<8x32xf32>
    %cst_65 = arith.constant dense<0.000000e+00> : vector<8xf32>
    %268 = vector.multi_reduction <add>, %267, %cst_65 [1] : vector<8x32xf32> to vector<8xf32>
    %269 = vector.shape_cast %268 : vector<8xf32> to vector<8x1xf32>
    %270 = arith.mulf %267, %267 : vector<8x32xf32>
    %cst_66 = arith.constant dense<0.000000e+00> : vector<8xf32>
    %271 = vector.multi_reduction <add>, %270, %cst_66 [1] : vector<8x32xf32> to vector<8xf32>
    %272 = vector.shape_cast %271 : vector<8xf32> to vector<8x1xf32>
    %cst_67 = arith.constant 3.125000e-02 : f32
    %273 = vector.broadcast %cst_67 : f32 to vector<8x1xf32>
    %274 = arith.mulf %269, %273 : vector<8x1xf32>
    %cst_68 = arith.constant 3.125000e-02 : f32
    %275 = vector.broadcast %cst_68 : f32 to vector<8x1xf32>
    %276 = arith.mulf %272, %275 : vector<8x1xf32>
    %277 = arith.mulf %274, %274 : vector<8x1xf32>
    %278 = arith.subf %276, %277 : vector<8x1xf32>
    %279 = vector.broadcast %274 : vector<8x1xf32> to vector<8x32xf32>
    %280 = arith.subf %267, %279 : vector<8x32xf32>
    %cst_69 = arith.constant 9.99999974E-6 : f32
    %281 = vector.broadcast %cst_69 : f32 to vector<8x1xf32>
    %282 = arith.addf %278, %281 : vector<8x1xf32>
    %283 = math.rsqrt %282 : vector<8x1xf32>
    %284 = vector.broadcast %283 : vector<8x1xf32> to vector<8x32xf32>
    %285 = arith.mulf %280, %284 : vector<8x32xf32>
    %286 = arith.mulf %285, %25 : vector<8x32xf32>
    %287 = arith.addf %286, %28 : vector<8x32xf32>
    %c2_70 = arith.constant 2 : index
    %c0_71 = arith.constant 0 : index
    %c0_72 = arith.constant 0 : index
    %288 = vector.load %arg4[%c2_70, %c0_71, %c0_72] : memref<8x8x32xf32, #tpu.memory_space<vmem>>, vector<1x8x32xf32>
    %289 = vector.shape_cast %288 : vector<1x8x32xf32> to vector<8x32xf32>
    %290 = vector.shape_cast %287 : vector<8x32xf32> to vector<1x8x32xf32>
    tpu.vector_store %arg4[%c2_70, %c0_71, %c0_72], %290 {strides = array<i32>} : memref<8x8x32xf32, #tpu.memory_space<vmem>>, vector<1x8x32xf32>,
    %c24 = arith.constant 24 : index
    %c0_73 = arith.constant 0 : index
    %291 = vector.load %arg7[%c24, %c0_73] : memref<64x160xf32, #tpu.memory_space<vmem>>, vector<8x160xf32>
    %292 = vector.extract_strided_slice %291 {offsets = [0, 0], sizes = [8, 128], strides = [1, 1]} : vector<8x160xf32> to vector<8x128xf32>
    %293 = arith.truncf %245 : vector<8x32xf32> to vector<8x32xbf16>
    %cst_74 = arith.constant dense<0.000000e+00> : vector<8x128xf32>
    %294 = tpu.matmul %293, %9, %cst_74 {dimension_numbers = #tpu.dot_dimension_numbers<[1], [0], [0], [1], [0, 0, 1, 1], [], []>} : vector<8x32xbf16>, vector<32x128xbf16>, vector<8x128xf32> -> vector<8x128xf32>
    %295 = arith.addf %292, %294 : vector<8x128xf32>
    %296 = arith.negf %295 : vector<8x128xf32>
    %297 = math.exp %296 : vector<8x128xf32>
    %cst_75 = arith.constant 1.000000e+00 : f32
    %298 = vector.broadcast %cst_75 : f32 to vector<8x128xf32>
    %299 = arith.addf %298, %297 : vector<8x128xf32>
    %300 = arith.divf %298, %299 : vector<8x128xf32>
    %301 = math.tanh %295 : vector<8x128xf32>
    %302 = vector.extract_strided_slice %300 {offsets = [0, 0], sizes = [8, 32], strides = [1, 1]} : vector<8x128xf32> to vector<8x32xf32>
    %303 = vector.extract_strided_slice %300 {offsets = [0, 32], sizes = [8, 32], strides = [1, 1]} : vector<8x128xf32> to vector<8x32xf32>
    %304 = vector.extract_strided_slice %301 {offsets = [0, 64], sizes = [8, 32], strides = [1, 1]} : vector<8x128xf32> to vector<8x32xf32>
    %305 = vector.extract_strided_slice %300 {offsets = [0, 96], sizes = [8, 32], strides = [1, 1]} : vector<8x128xf32> to vector<8x32xf32>
    %306 = arith.mulf %303, %221 : vector<8x32xf32>
    %307 = arith.mulf %302, %304 : vector<8x32xf32>
    %308 = arith.addf %306, %307 : vector<8x32xf32>
    %309 = math.tanh %308 : vector<8x32xf32>
    %310 = arith.mulf %305, %309 : vector<8x32xf32>
    %311 = vector.extract_strided_slice %291 {offsets = [0, 128], sizes = [8, 32], strides = [1, 1]} : vector<8x160xf32> to vector<8x32xf32>
    %312 = arith.addf %310, %311 : vector<8x32xf32>
    %cst_76 = arith.constant dense<0.000000e+00> : vector<8xf32>
    %313 = vector.multi_reduction <add>, %312, %cst_76 [1] : vector<8x32xf32> to vector<8xf32>
    %314 = vector.shape_cast %313 : vector<8xf32> to vector<8x1xf32>
    %315 = arith.mulf %312, %312 : vector<8x32xf32>
    %cst_77 = arith.constant dense<0.000000e+00> : vector<8xf32>
    %316 = vector.multi_reduction <add>, %315, %cst_77 [1] : vector<8x32xf32> to vector<8xf32>
    %317 = vector.shape_cast %316 : vector<8xf32> to vector<8x1xf32>
    %cst_78 = arith.constant 3.125000e-02 : f32
    %318 = vector.broadcast %cst_78 : f32 to vector<8x1xf32>
    %319 = arith.mulf %314, %318 : vector<8x1xf32>
    %cst_79 = arith.constant 3.125000e-02 : f32
    %320 = vector.broadcast %cst_79 : f32 to vector<8x1xf32>
    %321 = arith.mulf %317, %320 : vector<8x1xf32>
    %322 = arith.mulf %319, %319 : vector<8x1xf32>
    %323 = arith.subf %321, %322 : vector<8x1xf32>
    %324 = vector.broadcast %319 : vector<8x1xf32> to vector<8x32xf32>
    %325 = arith.subf %312, %324 : vector<8x32xf32>
    %cst_80 = arith.constant 9.99999974E-6 : f32
    %326 = vector.broadcast %cst_80 : f32 to vector<8x1xf32>
    %327 = arith.addf %323, %326 : vector<8x1xf32>
    %328 = math.rsqrt %327 : vector<8x1xf32>
    %329 = vector.broadcast %328 : vector<8x1xf32> to vector<8x32xf32>
    %330 = arith.mulf %325, %329 : vector<8x32xf32>
    %331 = arith.mulf %330, %19 : vector<8x32xf32>
    %332 = arith.addf %331, %22 : vector<8x32xf32>
    %333 = arith.truncf %332 : vector<8x32xf32> to vector<8x32xbf16>
    %cst_81 = arith.constant dense<0.000000e+00> : vector<8x128xf32>
    %334 = tpu.matmul %333, %11, %cst_81 {dimension_numbers = #tpu.dot_dimension_numbers<[1], [0], [0], [1], [0, 0, 1, 1], [], []>} : vector<8x32xbf16>, vector<32x128xbf16>, vector<8x128xf32> -> vector<8x128xf32>
    %335 = arith.truncf %287 : vector<8x32xf32> to vector<8x32xbf16>
    %cst_82 = arith.constant dense<0.000000e+00> : vector<8x128xf32>
    %336 = tpu.matmul %335, %13, %cst_82 {dimension_numbers = #tpu.dot_dimension_numbers<[1], [0], [0], [1], [0, 0, 1, 1], [], []>} : vector<8x32xbf16>, vector<32x128xbf16>, vector<8x128xf32> -> vector<8x128xf32>
    %337 = arith.addf %334, %336 : vector<8x128xf32>
    %338 = arith.addf %337, %16 : vector<8x128xf32>
    %339 = arith.negf %338 : vector<8x128xf32>
    %340 = math.exp %339 : vector<8x128xf32>
    %cst_83 = arith.constant 1.000000e+00 : f32
    %341 = vector.broadcast %cst_83 : f32 to vector<8x128xf32>
    %342 = arith.addf %341, %340 : vector<8x128xf32>
    %343 = arith.divf %341, %342 : vector<8x128xf32>
    %344 = math.tanh %338 : vector<8x128xf32>
    %345 = vector.extract_strided_slice %343 {offsets = [0, 0], sizes = [8, 32], strides = [1, 1]} : vector<8x128xf32> to vector<8x32xf32>
    %346 = vector.extract_strided_slice %343 {offsets = [0, 32], sizes = [8, 32], strides = [1, 1]} : vector<8x128xf32> to vector<8x32xf32>
    %347 = vector.extract_strided_slice %344 {offsets = [0, 64], sizes = [8, 32], strides = [1, 1]} : vector<8x128xf32> to vector<8x32xf32>
    %348 = vector.extract_strided_slice %343 {offsets = [0, 96], sizes = [8, 32], strides = [1, 1]} : vector<8x128xf32> to vector<8x32xf32>
    %349 = arith.mulf %346, %264 : vector<8x32xf32>
    %350 = arith.mulf %345, %347 : vector<8x32xf32>
    %351 = arith.addf %349, %350 : vector<8x32xf32>
    %352 = math.tanh %351 : vector<8x32xf32>
    %353 = arith.mulf %348, %352 : vector<8x32xf32>
    %354 = arith.addf %353, %332 : vector<8x32xf32>
    %cst_84 = arith.constant dense<0.000000e+00> : vector<8xf32>
    %355 = vector.multi_reduction <add>, %354, %cst_84 [1] : vector<8x32xf32> to vector<8xf32>
    %356 = vector.shape_cast %355 : vector<8xf32> to vector<8x1xf32>
    %357 = arith.mulf %354, %354 : vector<8x32xf32>
    %cst_85 = arith.constant dense<0.000000e+00> : vector<8xf32>
    %358 = vector.multi_reduction <add>, %357, %cst_85 [1] : vector<8x32xf32> to vector<8xf32>
    %359 = vector.shape_cast %358 : vector<8xf32> to vector<8x1xf32>
    %cst_86 = arith.constant 3.125000e-02 : f32
    %360 = vector.broadcast %cst_86 : f32 to vector<8x1xf32>
    %361 = arith.mulf %356, %360 : vector<8x1xf32>
    %cst_87 = arith.constant 3.125000e-02 : f32
    %362 = vector.broadcast %cst_87 : f32 to vector<8x1xf32>
    %363 = arith.mulf %359, %362 : vector<8x1xf32>
    %364 = arith.mulf %361, %361 : vector<8x1xf32>
    %365 = arith.subf %363, %364 : vector<8x1xf32>
    %366 = vector.broadcast %361 : vector<8x1xf32> to vector<8x32xf32>
    %367 = arith.subf %354, %366 : vector<8x32xf32>
    %cst_88 = arith.constant 9.99999974E-6 : f32
    %368 = vector.broadcast %cst_88 : f32 to vector<8x1xf32>
    %369 = arith.addf %365, %368 : vector<8x1xf32>
    %370 = math.rsqrt %369 : vector<8x1xf32>
    %371 = vector.broadcast %370 : vector<8x1xf32> to vector<8x32xf32>
    %372 = arith.mulf %367, %371 : vector<8x32xf32>
    %373 = arith.mulf %372, %25 : vector<8x32xf32>
    %374 = arith.addf %373, %28 : vector<8x32xf32>
    %c3 = arith.constant 3 : index
    %c0_89 = arith.constant 0 : index
    %c0_90 = arith.constant 0 : index
    %375 = vector.load %arg4[%c3, %c0_89, %c0_90] : memref<8x8x32xf32, #tpu.memory_space<vmem>>, vector<1x8x32xf32>
    %376 = vector.shape_cast %375 : vector<1x8x32xf32> to vector<8x32xf32>
    %377 = vector.shape_cast %374 : vector<8x32xf32> to vector<1x8x32xf32>
    tpu.vector_store %arg4[%c3, %c0_89, %c0_90], %377 {strides = array<i32>} : memref<8x8x32xf32, #tpu.memory_space<vmem>>, vector<1x8x32xf32>,
    %c32 = arith.constant 32 : index
    %c0_91 = arith.constant 0 : index
    %378 = vector.load %arg7[%c32, %c0_91] : memref<64x160xf32, #tpu.memory_space<vmem>>, vector<8x160xf32>
    %379 = vector.extract_strided_slice %378 {offsets = [0, 0], sizes = [8, 128], strides = [1, 1]} : vector<8x160xf32> to vector<8x128xf32>
    %380 = arith.truncf %332 : vector<8x32xf32> to vector<8x32xbf16>
    %cst_92 = arith.constant dense<0.000000e+00> : vector<8x128xf32>
    %381 = tpu.matmul %380, %9, %cst_92 {dimension_numbers = #tpu.dot_dimension_numbers<[1], [0], [0], [1], [0, 0, 1, 1], [], []>} : vector<8x32xbf16>, vector<32x128xbf16>, vector<8x128xf32> -> vector<8x128xf32>
    %382 = arith.addf %379, %381 : vector<8x128xf32>
    %383 = arith.negf %382 : vector<8x128xf32>
    %384 = math.exp %383 : vector<8x128xf32>
    %cst_93 = arith.constant 1.000000e+00 : f32
    %385 = vector.broadcast %cst_93 : f32 to vector<8x128xf32>
    %386 = arith.addf %385, %384 : vector<8x128xf32>
    %387 = arith.divf %385, %386 : vector<8x128xf32>
    %388 = math.tanh %382 : vector<8x128xf32>
    %389 = vector.extract_strided_slice %387 {offsets = [0, 0], sizes = [8, 32], strides = [1, 1]} : vector<8x128xf32> to vector<8x32xf32>
    %390 = vector.extract_strided_slice %387 {offsets = [0, 32], sizes = [8, 32], strides = [1, 1]} : vector<8x128xf32> to vector<8x32xf32>
    %391 = vector.extract_strided_slice %388 {offsets = [0, 64], sizes = [8, 32], strides = [1, 1]} : vector<8x128xf32> to vector<8x32xf32>
    %392 = vector.extract_strided_slice %387 {offsets = [0, 96], sizes = [8, 32], strides = [1, 1]} : vector<8x128xf32> to vector<8x32xf32>
    %393 = arith.mulf %390, %308 : vector<8x32xf32>
    %394 = arith.mulf %389, %391 : vector<8x32xf32>
    %395 = arith.addf %393, %394 : vector<8x32xf32>
    %396 = math.tanh %395 : vector<8x32xf32>
    %397 = arith.mulf %392, %396 : vector<8x32xf32>
    %398 = vector.extract_strided_slice %378 {offsets = [0, 128], sizes = [8, 32], strides = [1, 1]} : vector<8x160xf32> to vector<8x32xf32>
    %399 = arith.addf %397, %398 : vector<8x32xf32>
    %cst_94 = arith.constant dense<0.000000e+00> : vector<8xf32>
    %400 = vector.multi_reduction <add>, %399, %cst_94 [1] : vector<8x32xf32> to vector<8xf32>
    %401 = vector.shape_cast %400 : vector<8xf32> to vector<8x1xf32>
    %402 = arith.mulf %399, %399 : vector<8x32xf32>
    %cst_95 = arith.constant dense<0.000000e+00> : vector<8xf32>
    %403 = vector.multi_reduction <add>, %402, %cst_95 [1] : vector<8x32xf32> to vector<8xf32>
    %404 = vector.shape_cast %403 : vector<8xf32> to vector<8x1xf32>
    %cst_96 = arith.constant 3.125000e-02 : f32
    %405 = vector.broadcast %cst_96 : f32 to vector<8x1xf32>
    %406 = arith.mulf %401, %405 : vector<8x1xf32>
    %cst_97 = arith.constant 3.125000e-02 : f32
    %407 = vector.broadcast %cst_97 : f32 to vector<8x1xf32>
    %408 = arith.mulf %404, %407 : vector<8x1xf32>
    %409 = arith.mulf %406, %406 : vector<8x1xf32>
    %410 = arith.subf %408, %409 : vector<8x1xf32>
    %411 = vector.broadcast %406 : vector<8x1xf32> to vector<8x32xf32>
    %412 = arith.subf %399, %411 : vector<8x32xf32>
    %cst_98 = arith.constant 9.99999974E-6 : f32
    %413 = vector.broadcast %cst_98 : f32 to vector<8x1xf32>
    %414 = arith.addf %410, %413 : vector<8x1xf32>
    %415 = math.rsqrt %414 : vector<8x1xf32>
    %416 = vector.broadcast %415 : vector<8x1xf32> to vector<8x32xf32>
    %417 = arith.mulf %412, %416 : vector<8x32xf32>
    %418 = arith.mulf %417, %19 : vector<8x32xf32>
    %419 = arith.addf %418, %22 : vector<8x32xf32>
    %420 = arith.truncf %419 : vector<8x32xf32> to vector<8x32xbf16>
    %cst_99 = arith.constant dense<0.000000e+00> : vector<8x128xf32>
    %421 = tpu.matmul %420, %11, %cst_99 {dimension_numbers = #tpu.dot_dimension_numbers<[1], [0], [0], [1], [0, 0, 1, 1], [], []>} : vector<8x32xbf16>, vector<32x128xbf16>, vector<8x128xf32> -> vector<8x128xf32>
    %422 = arith.truncf %374 : vector<8x32xf32> to vector<8x32xbf16>
    %cst_100 = arith.constant dense<0.000000e+00> : vector<8x128xf32>
    %423 = tpu.matmul %422, %13, %cst_100 {dimension_numbers = #tpu.dot_dimension_numbers<[1], [0], [0], [1], [0, 0, 1, 1], [], []>} : vector<8x32xbf16>, vector<32x128xbf16>, vector<8x128xf32> -> vector<8x128xf32>
    %424 = arith.addf %421, %423 : vector<8x128xf32>
    %425 = arith.addf %424, %16 : vector<8x128xf32>
    %426 = arith.negf %425 : vector<8x128xf32>
    %427 = math.exp %426 : vector<8x128xf32>
    %cst_101 = arith.constant 1.000000e+00 : f32
    %428 = vector.broadcast %cst_101 : f32 to vector<8x128xf32>
    %429 = arith.addf %428, %427 : vector<8x128xf32>
    %430 = arith.divf %428, %429 : vector<8x128xf32>
    %431 = math.tanh %425 : vector<8x128xf32>
    %432 = vector.extract_strided_slice %430 {offsets = [0, 0], sizes = [8, 32], strides = [1, 1]} : vector<8x128xf32> to vector<8x32xf32>
    %433 = vector.extract_strided_slice %430 {offsets = [0, 32], sizes = [8, 32], strides = [1, 1]} : vector<8x128xf32> to vector<8x32xf32>
    %434 = vector.extract_strided_slice %431 {offsets = [0, 64], sizes = [8, 32], strides = [1, 1]} : vector<8x128xf32> to vector<8x32xf32>
    %435 = vector.extract_strided_slice %430 {offsets = [0, 96], sizes = [8, 32], strides = [1, 1]} : vector<8x128xf32> to vector<8x32xf32>
    %436 = arith.mulf %433, %351 : vector<8x32xf32>
    %437 = arith.mulf %432, %434 : vector<8x32xf32>
    %438 = arith.addf %436, %437 : vector<8x32xf32>
    %439 = math.tanh %438 : vector<8x32xf32>
    %440 = arith.mulf %435, %439 : vector<8x32xf32>
    %441 = arith.addf %440, %419 : vector<8x32xf32>
    %cst_102 = arith.constant dense<0.000000e+00> : vector<8xf32>
    %442 = vector.multi_reduction <add>, %441, %cst_102 [1] : vector<8x32xf32> to vector<8xf32>
    %443 = vector.shape_cast %442 : vector<8xf32> to vector<8x1xf32>
    %444 = arith.mulf %441, %441 : vector<8x32xf32>
    %cst_103 = arith.constant dense<0.000000e+00> : vector<8xf32>
    %445 = vector.multi_reduction <add>, %444, %cst_103 [1] : vector<8x32xf32> to vector<8xf32>
    %446 = vector.shape_cast %445 : vector<8xf32> to vector<8x1xf32>
    %cst_104 = arith.constant 3.125000e-02 : f32
    %447 = vector.broadcast %cst_104 : f32 to vector<8x1xf32>
    %448 = arith.mulf %443, %447 : vector<8x1xf32>
    %cst_105 = arith.constant 3.125000e-02 : f32
    %449 = vector.broadcast %cst_105 : f32 to vector<8x1xf32>
    %450 = arith.mulf %446, %449 : vector<8x1xf32>
    %451 = arith.mulf %448, %448 : vector<8x1xf32>
    %452 = arith.subf %450, %451 : vector<8x1xf32>
    %453 = vector.broadcast %448 : vector<8x1xf32> to vector<8x32xf32>
    %454 = arith.subf %441, %453 : vector<8x32xf32>
    %cst_106 = arith.constant 9.99999974E-6 : f32
    %455 = vector.broadcast %cst_106 : f32 to vector<8x1xf32>
    %456 = arith.addf %452, %455 : vector<8x1xf32>
    %457 = math.rsqrt %456 : vector<8x1xf32>
    %458 = vector.broadcast %457 : vector<8x1xf32> to vector<8x32xf32>
    %459 = arith.mulf %454, %458 : vector<8x32xf32>
    %460 = arith.mulf %459, %25 : vector<8x32xf32>
    %461 = arith.addf %460, %28 : vector<8x32xf32>
    %c4 = arith.constant 4 : index
    %c0_107 = arith.constant 0 : index
    %c0_108 = arith.constant 0 : index
    %462 = vector.load %arg4[%c4, %c0_107, %c0_108] : memref<8x8x32xf32, #tpu.memory_space<vmem>>, vector<1x8x32xf32>
    %463 = vector.shape_cast %462 : vector<1x8x32xf32> to vector<8x32xf32>
    %464 = vector.shape_cast %461 : vector<8x32xf32> to vector<1x8x32xf32>
    tpu.vector_store %arg4[%c4, %c0_107, %c0_108], %464 {strides = array<i32>} : memref<8x8x32xf32, #tpu.memory_space<vmem>>, vector<1x8x32xf32>,
    %c40 = arith.constant 40 : index
    %c0_109 = arith.constant 0 : index
    %465 = vector.load %arg7[%c40, %c0_109] : memref<64x160xf32, #tpu.memory_space<vmem>>, vector<8x160xf32>
    %466 = vector.extract_strided_slice %465 {offsets = [0, 0], sizes = [8, 128], strides = [1, 1]} : vector<8x160xf32> to vector<8x128xf32>
    %467 = arith.truncf %419 : vector<8x32xf32> to vector<8x32xbf16>
    %cst_110 = arith.constant dense<0.000000e+00> : vector<8x128xf32>
    %468 = tpu.matmul %467, %9, %cst_110 {dimension_numbers = #tpu.dot_dimension_numbers<[1], [0], [0], [1], [0, 0, 1, 1], [], []>} : vector<8x32xbf16>, vector<32x128xbf16>, vector<8x128xf32> -> vector<8x128xf32>
    %469 = arith.addf %466, %468 : vector<8x128xf32>
    %470 = arith.negf %469 : vector<8x128xf32>
    %471 = math.exp %470 : vector<8x128xf32>
    %cst_111 = arith.constant 1.000000e+00 : f32
    %472 = vector.broadcast %cst_111 : f32 to vector<8x128xf32>
    %473 = arith.addf %472, %471 : vector<8x128xf32>
    %474 = arith.divf %472, %473 : vector<8x128xf32>
    %475 = math.tanh %469 : vector<8x128xf32>
    %476 = vector.extract_strided_slice %474 {offsets = [0, 0], sizes = [8, 32], strides = [1, 1]} : vector<8x128xf32> to vector<8x32xf32>
    %477 = vector.extract_strided_slice %474 {offsets = [0, 32], sizes = [8, 32], strides = [1, 1]} : vector<8x128xf32> to vector<8x32xf32>
    %478 = vector.extract_strided_slice %475 {offsets = [0, 64], sizes = [8, 32], strides = [1, 1]} : vector<8x128xf32> to vector<8x32xf32>
    %479 = vector.extract_strided_slice %474 {offsets = [0, 96], sizes = [8, 32], strides = [1, 1]} : vector<8x128xf32> to vector<8x32xf32>
    %480 = arith.mulf %477, %395 : vector<8x32xf32>
    %481 = arith.mulf %476, %478 : vector<8x32xf32>
    %482 = arith.addf %480, %481 : vector<8x32xf32>
    %483 = math.tanh %482 : vector<8x32xf32>
    %484 = arith.mulf %479, %483 : vector<8x32xf32>
    %485 = vector.extract_strided_slice %465 {offsets = [0, 128], sizes = [8, 32], strides = [1, 1]} : vector<8x160xf32> to vector<8x32xf32>
    %486 = arith.addf %484, %485 : vector<8x32xf32>
    %cst_112 = arith.constant dense<0.000000e+00> : vector<8xf32>
    %487 = vector.multi_reduction <add>, %486, %cst_112 [1] : vector<8x32xf32> to vector<8xf32>
    %488 = vector.shape_cast %487 : vector<8xf32> to vector<8x1xf32>
    %489 = arith.mulf %486, %486 : vector<8x32xf32>
    %cst_113 = arith.constant dense<0.000000e+00> : vector<8xf32>
    %490 = vector.multi_reduction <add>, %489, %cst_113 [1] : vector<8x32xf32> to vector<8xf32>
    %491 = vector.shape_cast %490 : vector<8xf32> to vector<8x1xf32>
    %cst_114 = arith.constant 3.125000e-02 : f32
    %492 = vector.broadcast %cst_114 : f32 to vector<8x1xf32>
    %493 = arith.mulf %488, %492 : vector<8x1xf32>
    %cst_115 = arith.constant 3.125000e-02 : f32
    %494 = vector.broadcast %cst_115 : f32 to vector<8x1xf32>
    %495 = arith.mulf %491, %494 : vector<8x1xf32>
    %496 = arith.mulf %493, %493 : vector<8x1xf32>
    %497 = arith.subf %495, %496 : vector<8x1xf32>
    %498 = vector.broadcast %493 : vector<8x1xf32> to vector<8x32xf32>
    %499 = arith.subf %486, %498 : vector<8x32xf32>
    %cst_116 = arith.constant 9.99999974E-6 : f32
    %500 = vector.broadcast %cst_116 : f32 to vector<8x1xf32>
    %501 = arith.addf %497, %500 : vector<8x1xf32>
    %502 = math.rsqrt %501 : vector<8x1xf32>
    %503 = vector.broadcast %502 : vector<8x1xf32> to vector<8x32xf32>
    %504 = arith.mulf %499, %503 : vector<8x32xf32>
    %505 = arith.mulf %504, %19 : vector<8x32xf32>
    %506 = arith.addf %505, %22 : vector<8x32xf32>
    %507 = arith.truncf %506 : vector<8x32xf32> to vector<8x32xbf16>
    %cst_117 = arith.constant dense<0.000000e+00> : vector<8x128xf32>
    %508 = tpu.matmul %507, %11, %cst_117 {dimension_numbers = #tpu.dot_dimension_numbers<[1], [0], [0], [1], [0, 0, 1, 1], [], []>} : vector<8x32xbf16>, vector<32x128xbf16>, vector<8x128xf32> -> vector<8x128xf32>
    %509 = arith.truncf %461 : vector<8x32xf32> to vector<8x32xbf16>
    %cst_118 = arith.constant dense<0.000000e+00> : vector<8x128xf32>
    %510 = tpu.matmul %509, %13, %cst_118 {dimension_numbers = #tpu.dot_dimension_numbers<[1], [0], [0], [1], [0, 0, 1, 1], [], []>} : vector<8x32xbf16>, vector<32x128xbf16>, vector<8x128xf32> -> vector<8x128xf32>
    %511 = arith.addf %508, %510 : vector<8x128xf32>
    %512 = arith.addf %511, %16 : vector<8x128xf32>
    %513 = arith.negf %512 : vector<8x128xf32>
    %514 = math.exp %513 : vector<8x128xf32>
    %cst_119 = arith.constant 1.000000e+00 : f32
    %515 = vector.broadcast %cst_119 : f32 to vector<8x128xf32>
    %516 = arith.addf %515, %514 : vector<8x128xf32>
    %517 = arith.divf %515, %516 : vector<8x128xf32>
    %518 = math.tanh %512 : vector<8x128xf32>
    %519 = vector.extract_strided_slice %517 {offsets = [0, 0], sizes = [8, 32], strides = [1, 1]} : vector<8x128xf32> to vector<8x32xf32>
    %520 = vector.extract_strided_slice %517 {offsets = [0, 32], sizes = [8, 32], strides = [1, 1]} : vector<8x128xf32> to vector<8x32xf32>
    %521 = vector.extract_strided_slice %518 {offsets = [0, 64], sizes = [8, 32], strides = [1, 1]} : vector<8x128xf32> to vector<8x32xf32>
    %522 = vector.extract_strided_slice %517 {offsets = [0, 96], sizes = [8, 32], strides = [1, 1]} : vector<8x128xf32> to vector<8x32xf32>
    %523 = arith.mulf %520, %438 : vector<8x32xf32>
    %524 = arith.mulf %519, %521 : vector<8x32xf32>
    %525 = arith.addf %523, %524 : vector<8x32xf32>
    %526 = math.tanh %525 : vector<8x32xf32>
    %527 = arith.mulf %522, %526 : vector<8x32xf32>
    %528 = arith.addf %527, %506 : vector<8x32xf32>
    %cst_120 = arith.constant dense<0.000000e+00> : vector<8xf32>
    %529 = vector.multi_reduction <add>, %528, %cst_120 [1] : vector<8x32xf32> to vector<8xf32>
    %530 = vector.shape_cast %529 : vector<8xf32> to vector<8x1xf32>
    %531 = arith.mulf %528, %528 : vector<8x32xf32>
    %cst_121 = arith.constant dense<0.000000e+00> : vector<8xf32>
    %532 = vector.multi_reduction <add>, %531, %cst_121 [1] : vector<8x32xf32> to vector<8xf32>
    %533 = vector.shape_cast %532 : vector<8xf32> to vector<8x1xf32>
    %cst_122 = arith.constant 3.125000e-02 : f32
    %534 = vector.broadcast %cst_122 : f32 to vector<8x1xf32>
    %535 = arith.mulf %530, %534 : vector<8x1xf32>
    %cst_123 = arith.constant 3.125000e-02 : f32
    %536 = vector.broadcast %cst_123 : f32 to vector<8x1xf32>
    %537 = arith.mulf %533, %536 : vector<8x1xf32>
    %538 = arith.mulf %535, %535 : vector<8x1xf32>
    %539 = arith.subf %537, %538 : vector<8x1xf32>
    %540 = vector.broadcast %535 : vector<8x1xf32> to vector<8x32xf32>
    %541 = arith.subf %528, %540 : vector<8x32xf32>
    %cst_124 = arith.constant 9.99999974E-6 : f32
    %542 = vector.broadcast %cst_124 : f32 to vector<8x1xf32>
    %543 = arith.addf %539, %542 : vector<8x1xf32>
    %544 = math.rsqrt %543 : vector<8x1xf32>
    %545 = vector.broadcast %544 : vector<8x1xf32> to vector<8x32xf32>
    %546 = arith.mulf %541, %545 : vector<8x32xf32>
    %547 = arith.mulf %546, %25 : vector<8x32xf32>
    %548 = arith.addf %547, %28 : vector<8x32xf32>
    %c5 = arith.constant 5 : index
    %c0_125 = arith.constant 0 : index
    %c0_126 = arith.constant 0 : index
    %549 = vector.load %arg4[%c5, %c0_125, %c0_126] : memref<8x8x32xf32, #tpu.memory_space<vmem>>, vector<1x8x32xf32>
    %550 = vector.shape_cast %549 : vector<1x8x32xf32> to vector<8x32xf32>
    %551 = vector.shape_cast %548 : vector<8x32xf32> to vector<1x8x32xf32>
    tpu.vector_store %arg4[%c5, %c0_125, %c0_126], %551 {strides = array<i32>} : memref<8x8x32xf32, #tpu.memory_space<vmem>>, vector<1x8x32xf32>,
    %c48 = arith.constant 48 : index
    %c0_127 = arith.constant 0 : index
    %552 = vector.load %arg7[%c48, %c0_127] : memref<64x160xf32, #tpu.memory_space<vmem>>, vector<8x160xf32>
    %553 = vector.extract_strided_slice %552 {offsets = [0, 0], sizes = [8, 128], strides = [1, 1]} : vector<8x160xf32> to vector<8x128xf32>
    %554 = arith.truncf %506 : vector<8x32xf32> to vector<8x32xbf16>
    %cst_128 = arith.constant dense<0.000000e+00> : vector<8x128xf32>
    %555 = tpu.matmul %554, %9, %cst_128 {dimension_numbers = #tpu.dot_dimension_numbers<[1], [0], [0], [1], [0, 0, 1, 1], [], []>} : vector<8x32xbf16>, vector<32x128xbf16>, vector<8x128xf32> -> vector<8x128xf32>
    %556 = arith.addf %553, %555 : vector<8x128xf32>
    %557 = arith.negf %556 : vector<8x128xf32>
    %558 = math.exp %557 : vector<8x128xf32>
    %cst_129 = arith.constant 1.000000e+00 : f32
    %559 = vector.broadcast %cst_129 : f32 to vector<8x128xf32>
    %560 = arith.addf %559, %558 : vector<8x128xf32>
    %561 = arith.divf %559, %560 : vector<8x128xf32>
    %562 = math.tanh %556 : vector<8x128xf32>
    %563 = vector.extract_strided_slice %561 {offsets = [0, 0], sizes = [8, 32], strides = [1, 1]} : vector<8x128xf32> to vector<8x32xf32>
    %564 = vector.extract_strided_slice %561 {offsets = [0, 32], sizes = [8, 32], strides = [1, 1]} : vector<8x128xf32> to vector<8x32xf32>
    %565 = vector.extract_strided_slice %562 {offsets = [0, 64], sizes = [8, 32], strides = [1, 1]} : vector<8x128xf32> to vector<8x32xf32>
    %566 = vector.extract_strided_slice %561 {offsets = [0, 96], sizes = [8, 32], strides = [1, 1]} : vector<8x128xf32> to vector<8x32xf32>
    %567 = arith.mulf %564, %482 : vector<8x32xf32>
    %568 = arith.mulf %563, %565 : vector<8x32xf32>
    %569 = arith.addf %567, %568 : vector<8x32xf32>
    %570 = math.tanh %569 : vector<8x32xf32>
    %571 = arith.mulf %566, %570 : vector<8x32xf32>
    %572 = vector.extract_strided_slice %552 {offsets = [0, 128], sizes = [8, 32], strides = [1, 1]} : vector<8x160xf32> to vector<8x32xf32>
    %573 = arith.addf %571, %572 : vector<8x32xf32>
    %cst_130 = arith.constant dense<0.000000e+00> : vector<8xf32>
    %574 = vector.multi_reduction <add>, %573, %cst_130 [1] : vector<8x32xf32> to vector<8xf32>
    %575 = vector.shape_cast %574 : vector<8xf32> to vector<8x1xf32>
    %576 = arith.mulf %573, %573 : vector<8x32xf32>
    %cst_131 = arith.constant dense<0.000000e+00> : vector<8xf32>
    %577 = vector.multi_reduction <add>, %576, %cst_131 [1] : vector<8x32xf32> to vector<8xf32>
    %578 = vector.shape_cast %577 : vector<8xf32> to vector<8x1xf32>
    %cst_132 = arith.constant 3.125000e-02 : f32
    %579 = vector.broadcast %cst_132 : f32 to vector<8x1xf32>
    %580 = arith.mulf %575, %579 : vector<8x1xf32>
    %cst_133 = arith.constant 3.125000e-02 : f32
    %581 = vector.broadcast %cst_133 : f32 to vector<8x1xf32>
    %582 = arith.mulf %578, %581 : vector<8x1xf32>
    %583 = arith.mulf %580, %580 : vector<8x1xf32>
    %584 = arith.subf %582, %583 : vector<8x1xf32>
    %585 = vector.broadcast %580 : vector<8x1xf32> to vector<8x32xf32>
    %586 = arith.subf %573, %585 : vector<8x32xf32>
    %cst_134 = arith.constant 9.99999974E-6 : f32
    %587 = vector.broadcast %cst_134 : f32 to vector<8x1xf32>
    %588 = arith.addf %584, %587 : vector<8x1xf32>
    %589 = math.rsqrt %588 : vector<8x1xf32>
    %590 = vector.broadcast %589 : vector<8x1xf32> to vector<8x32xf32>
    %591 = arith.mulf %586, %590 : vector<8x32xf32>
    %592 = arith.mulf %591, %19 : vector<8x32xf32>
    %593 = arith.addf %592, %22 : vector<8x32xf32>
    %594 = arith.truncf %593 : vector<8x32xf32> to vector<8x32xbf16>
    %cst_135 = arith.constant dense<0.000000e+00> : vector<8x128xf32>
    %595 = tpu.matmul %594, %11, %cst_135 {dimension_numbers = #tpu.dot_dimension_numbers<[1], [0], [0], [1], [0, 0, 1, 1], [], []>} : vector<8x32xbf16>, vector<32x128xbf16>, vector<8x128xf32> -> vector<8x128xf32>
    %596 = arith.truncf %548 : vector<8x32xf32> to vector<8x32xbf16>
    %cst_136 = arith.constant dense<0.000000e+00> : vector<8x128xf32>
    %597 = tpu.matmul %596, %13, %cst_136 {dimension_numbers = #tpu.dot_dimension_numbers<[1], [0], [0], [1], [0, 0, 1, 1], [], []>} : vector<8x32xbf16>, vector<32x128xbf16>, vector<8x128xf32> -> vector<8x128xf32>
    %598 = arith.addf %595, %597 : vector<8x128xf32>
    %599 = arith.addf %598, %16 : vector<8x128xf32>
    %600 = arith.negf %599 : vector<8x128xf32>
    %601 = math.exp %600 : vector<8x128xf32>
    %cst_137 = arith.constant 1.000000e+00 : f32
    %602 = vector.broadcast %cst_137 : f32 to vector<8x128xf32>
    %603 = arith.addf %602, %601 : vector<8x128xf32>
    %604 = arith.divf %602, %603 : vector<8x128xf32>
    %605 = math.tanh %599 : vector<8x128xf32>
    %606 = vector.extract_strided_slice %604 {offsets = [0, 0], sizes = [8, 32], strides = [1, 1]} : vector<8x128xf32> to vector<8x32xf32>
    %607 = vector.extract_strided_slice %604 {offsets = [0, 32], sizes = [8, 32], strides = [1, 1]} : vector<8x128xf32> to vector<8x32xf32>
    %608 = vector.extract_strided_slice %605 {offsets = [0, 64], sizes = [8, 32], strides = [1, 1]} : vector<8x128xf32> to vector<8x32xf32>
    %609 = vector.extract_strided_slice %604 {offsets = [0, 96], sizes = [8, 32], strides = [1, 1]} : vector<8x128xf32> to vector<8x32xf32>
    %610 = arith.mulf %607, %525 : vector<8x32xf32>
    %611 = arith.mulf %606, %608 : vector<8x32xf32>
    %612 = arith.addf %610, %611 : vector<8x32xf32>
    %613 = math.tanh %612 : vector<8x32xf32>
    %614 = arith.mulf %609, %613 : vector<8x32xf32>
    %615 = arith.addf %614, %593 : vector<8x32xf32>
    %cst_138 = arith.constant dense<0.000000e+00> : vector<8xf32>
    %616 = vector.multi_reduction <add>, %615, %cst_138 [1] : vector<8x32xf32> to vector<8xf32>
    %617 = vector.shape_cast %616 : vector<8xf32> to vector<8x1xf32>
    %618 = arith.mulf %615, %615 : vector<8x32xf32>
    %cst_139 = arith.constant dense<0.000000e+00> : vector<8xf32>
    %619 = vector.multi_reduction <add>, %618, %cst_139 [1] : vector<8x32xf32> to vector<8xf32>
    %620 = vector.shape_cast %619 : vector<8xf32> to vector<8x1xf32>
    %cst_140 = arith.constant 3.125000e-02 : f32
    %621 = vector.broadcast %cst_140 : f32 to vector<8x1xf32>
    %622 = arith.mulf %617, %621 : vector<8x1xf32>
    %cst_141 = arith.constant 3.125000e-02 : f32
    %623 = vector.broadcast %cst_141 : f32 to vector<8x1xf32>
    %624 = arith.mulf %620, %623 : vector<8x1xf32>
    %625 = arith.mulf %622, %622 : vector<8x1xf32>
    %626 = arith.subf %624, %625 : vector<8x1xf32>
    %627 = vector.broadcast %622 : vector<8x1xf32> to vector<8x32xf32>
    %628 = arith.subf %615, %627 : vector<8x32xf32>
    %cst_142 = arith.constant 9.99999974E-6 : f32
    %629 = vector.broadcast %cst_142 : f32 to vector<8x1xf32>
    %630 = arith.addf %626, %629 : vector<8x1xf32>
    %631 = math.rsqrt %630 : vector<8x1xf32>
    %632 = vector.broadcast %631 : vector<8x1xf32> to vector<8x32xf32>
    %633 = arith.mulf %628, %632 : vector<8x32xf32>
    %634 = arith.mulf %633, %25 : vector<8x32xf32>
    %635 = arith.addf %634, %28 : vector<8x32xf32>
    %c6 = arith.constant 6 : index
    %c0_143 = arith.constant 0 : index
    %c0_144 = arith.constant 0 : index
    %636 = vector.load %arg4[%c6, %c0_143, %c0_144] : memref<8x8x32xf32, #tpu.memory_space<vmem>>, vector<1x8x32xf32>
    %637 = vector.shape_cast %636 : vector<1x8x32xf32> to vector<8x32xf32>
    %638 = vector.shape_cast %635 : vector<8x32xf32> to vector<1x8x32xf32>
    tpu.vector_store %arg4[%c6, %c0_143, %c0_144], %638 {strides = array<i32>} : memref<8x8x32xf32, #tpu.memory_space<vmem>>, vector<1x8x32xf32>,
    %c56 = arith.constant 56 : index
    %c0_145 = arith.constant 0 : index
    %639 = vector.load %arg7[%c56, %c0_145] : memref<64x160xf32, #tpu.memory_space<vmem>>, vector<8x160xf32>
    %640 = vector.extract_strided_slice %639 {offsets = [0, 0], sizes = [8, 128], strides = [1, 1]} : vector<8x160xf32> to vector<8x128xf32>
    %641 = arith.truncf %593 : vector<8x32xf32> to vector<8x32xbf16>
    %cst_146 = arith.constant dense<0.000000e+00> : vector<8x128xf32>
    %642 = tpu.matmul %641, %9, %cst_146 {dimension_numbers = #tpu.dot_dimension_numbers<[1], [0], [0], [1], [0, 0, 1, 1], [], []>} : vector<8x32xbf16>, vector<32x128xbf16>, vector<8x128xf32> -> vector<8x128xf32>
    %643 = arith.addf %640, %642 : vector<8x128xf32>
    %644 = arith.negf %643 : vector<8x128xf32>
    %645 = math.exp %644 : vector<8x128xf32>
    %cst_147 = arith.constant 1.000000e+00 : f32
    %646 = vector.broadcast %cst_147 : f32 to vector<8x128xf32>
    %647 = arith.addf %646, %645 : vector<8x128xf32>
    %648 = arith.divf %646, %647 : vector<8x128xf32>
    %649 = math.tanh %643 : vector<8x128xf32>
    %650 = vector.extract_strided_slice %648 {offsets = [0, 0], sizes = [8, 32], strides = [1, 1]} : vector<8x128xf32> to vector<8x32xf32>
    %651 = vector.extract_strided_slice %648 {offsets = [0, 32], sizes = [8, 32], strides = [1, 1]} : vector<8x128xf32> to vector<8x32xf32>
    %652 = vector.extract_strided_slice %649 {offsets = [0, 64], sizes = [8, 32], strides = [1, 1]} : vector<8x128xf32> to vector<8x32xf32>
    %653 = vector.extract_strided_slice %648 {offsets = [0, 96], sizes = [8, 32], strides = [1, 1]} : vector<8x128xf32> to vector<8x32xf32>
    %654 = arith.mulf %651, %569 : vector<8x32xf32>
    %655 = arith.mulf %650, %652 : vector<8x32xf32>
    %656 = arith.addf %654, %655 : vector<8x32xf32>
    %657 = math.tanh %656 : vector<8x32xf32>
    %658 = arith.mulf %653, %657 : vector<8x32xf32>
    %659 = vector.extract_strided_slice %639 {offsets = [0, 128], sizes = [8, 32], strides = [1, 1]} : vector<8x160xf32> to vector<8x32xf32>
    %660 = arith.addf %658, %659 : vector<8x32xf32>
    %cst_148 = arith.constant dense<0.000000e+00> : vector<8xf32>
    %661 = vector.multi_reduction <add>, %660, %cst_148 [1] : vector<8x32xf32> to vector<8xf32>
    %662 = vector.shape_cast %661 : vector<8xf32> to vector<8x1xf32>
    %663 = arith.mulf %660, %660 : vector<8x32xf32>
    %cst_149 = arith.constant dense<0.000000e+00> : vector<8xf32>
    %664 = vector.multi_reduction <add>, %663, %cst_149 [1] : vector<8x32xf32> to vector<8xf32>
    %665 = vector.shape_cast %664 : vector<8xf32> to vector<8x1xf32>
    %cst_150 = arith.constant 3.125000e-02 : f32
    %666 = vector.broadcast %cst_150 : f32 to vector<8x1xf32>
    %667 = arith.mulf %662, %666 : vector<8x1xf32>
    %cst_151 = arith.constant 3.125000e-02 : f32
    %668 = vector.broadcast %cst_151 : f32 to vector<8x1xf32>
    %669 = arith.mulf %665, %668 : vector<8x1xf32>
    %670 = arith.mulf %667, %667 : vector<8x1xf32>
    %671 = arith.subf %669, %670 : vector<8x1xf32>
    %672 = vector.broadcast %667 : vector<8x1xf32> to vector<8x32xf32>
    %673 = arith.subf %660, %672 : vector<8x32xf32>
    %cst_152 = arith.constant 9.99999974E-6 : f32
    %674 = vector.broadcast %cst_152 : f32 to vector<8x1xf32>
    %675 = arith.addf %671, %674 : vector<8x1xf32>
    %676 = math.rsqrt %675 : vector<8x1xf32>
    %677 = vector.broadcast %676 : vector<8x1xf32> to vector<8x32xf32>
    %678 = arith.mulf %673, %677 : vector<8x32xf32>
    %679 = arith.mulf %678, %19 : vector<8x32xf32>
    %680 = arith.addf %679, %22 : vector<8x32xf32>
    %681 = arith.truncf %680 : vector<8x32xf32> to vector<8x32xbf16>
    %cst_153 = arith.constant dense<0.000000e+00> : vector<8x128xf32>
    %682 = tpu.matmul %681, %11, %cst_153 {dimension_numbers = #tpu.dot_dimension_numbers<[1], [0], [0], [1], [0, 0, 1, 1], [], []>} : vector<8x32xbf16>, vector<32x128xbf16>, vector<8x128xf32> -> vector<8x128xf32>
    %683 = arith.truncf %635 : vector<8x32xf32> to vector<8x32xbf16>
    %cst_154 = arith.constant dense<0.000000e+00> : vector<8x128xf32>
    %684 = tpu.matmul %683, %13, %cst_154 {dimension_numbers = #tpu.dot_dimension_numbers<[1], [0], [0], [1], [0, 0, 1, 1], [], []>} : vector<8x32xbf16>, vector<32x128xbf16>, vector<8x128xf32> -> vector<8x128xf32>
    %685 = arith.addf %682, %684 : vector<8x128xf32>
    %686 = arith.addf %685, %16 : vector<8x128xf32>
    %687 = arith.negf %686 : vector<8x128xf32>
    %688 = math.exp %687 : vector<8x128xf32>
    %cst_155 = arith.constant 1.000000e+00 : f32
    %689 = vector.broadcast %cst_155 : f32 to vector<8x128xf32>
    %690 = arith.addf %689, %688 : vector<8x128xf32>
    %691 = arith.divf %689, %690 : vector<8x128xf32>
    %692 = math.tanh %686 : vector<8x128xf32>
    %693 = vector.extract_strided_slice %691 {offsets = [0, 0], sizes = [8, 32], strides = [1, 1]} : vector<8x128xf32> to vector<8x32xf32>
    %694 = vector.extract_strided_slice %691 {offsets = [0, 32], sizes = [8, 32], strides = [1, 1]} : vector<8x128xf32> to vector<8x32xf32>
    %695 = vector.extract_strided_slice %692 {offsets = [0, 64], sizes = [8, 32], strides = [1, 1]} : vector<8x128xf32> to vector<8x32xf32>
    %696 = vector.extract_strided_slice %691 {offsets = [0, 96], sizes = [8, 32], strides = [1, 1]} : vector<8x128xf32> to vector<8x32xf32>
    %697 = arith.mulf %694, %612 : vector<8x32xf32>
    %698 = arith.mulf %693, %695 : vector<8x32xf32>
    %699 = arith.addf %697, %698 : vector<8x32xf32>
    %700 = math.tanh %699 : vector<8x32xf32>
    %701 = arith.mulf %696, %700 : vector<8x32xf32>
    %702 = arith.addf %701, %680 : vector<8x32xf32>
    %cst_156 = arith.constant dense<0.000000e+00> : vector<8xf32>
    %703 = vector.multi_reduction <add>, %702, %cst_156 [1] : vector<8x32xf32> to vector<8xf32>
    %704 = vector.shape_cast %703 : vector<8xf32> to vector<8x1xf32>
    %705 = arith.mulf %702, %702 : vector<8x32xf32>
    %cst_157 = arith.constant dense<0.000000e+00> : vector<8xf32>
    %706 = vector.multi_reduction <add>, %705, %cst_157 [1] : vector<8x32xf32> to vector<8xf32>
    %707 = vector.shape_cast %706 : vector<8xf32> to vector<8x1xf32>
    %cst_158 = arith.constant 3.125000e-02 : f32
    %708 = vector.broadcast %cst_158 : f32 to vector<8x1xf32>
    %709 = arith.mulf %704, %708 : vector<8x1xf32>
    %cst_159 = arith.constant 3.125000e-02 : f32
    %710 = vector.broadcast %cst_159 : f32 to vector<8x1xf32>
    %711 = arith.mulf %707, %710 : vector<8x1xf32>
    %712 = arith.mulf %709, %709 : vector<8x1xf32>
    %713 = arith.subf %711, %712 : vector<8x1xf32>
    %714 = vector.broadcast %709 : vector<8x1xf32> to vector<8x32xf32>
    %715 = arith.subf %702, %714 : vector<8x32xf32>
    %cst_160 = arith.constant 9.99999974E-6 : f32
    %716 = vector.broadcast %cst_160 : f32 to vector<8x1xf32>
    %717 = arith.addf %713, %716 : vector<8x1xf32>
    %718 = math.rsqrt %717 : vector<8x1xf32>
    %719 = vector.broadcast %718 : vector<8x1xf32> to vector<8x32xf32>
    %720 = arith.mulf %715, %719 : vector<8x32xf32>
    %721 = arith.mulf %720, %25 : vector<8x32xf32>
    %722 = arith.addf %721, %28 : vector<8x32xf32>
    %c7 = arith.constant 7 : index
    %c0_161 = arith.constant 0 : index
    %c0_162 = arith.constant 0 : index
    %723 = vector.load %arg4[%c7, %c0_161, %c0_162] : memref<8x8x32xf32, #tpu.memory_space<vmem>>, vector<1x8x32xf32>
    %724 = vector.shape_cast %723 : vector<1x8x32xf32> to vector<8x32xf32>
    %725 = vector.shape_cast %722 : vector<8x32xf32> to vector<1x8x32xf32>
    tpu.vector_store %arg4[%c7, %c0_161, %c0_162], %725 {strides = array<i32>} : memref<8x8x32xf32, #tpu.memory_space<vmem>>, vector<1x8x32xf32>,
    %c0_163 = arith.constant 0 : index
    %c0_164 = arith.constant 0 : index
    %c0_165 = arith.constant 0 : index
    %726 = vector.load %arg5[%c0_163, %c0_164, %c0_165] : memref<2x8x32xf32, #tpu.memory_space<vmem>>, vector<1x8x32xf32>
    %727 = vector.shape_cast %726 : vector<1x8x32xf32> to vector<8x32xf32>
    %728 = vector.shape_cast %680 : vector<8x32xf32> to vector<1x8x32xf32>
    tpu.vector_store %arg5[%c0_163, %c0_164, %c0_165], %728 {strides = array<i32>} : memref<2x8x32xf32, #tpu.memory_space<vmem>>, vector<1x8x32xf32>,
    %c1_166 = arith.constant 1 : index
    %c0_167 = arith.constant 0 : index
    %c0_168 = arith.constant 0 : index
    %729 = vector.load %arg5[%c1_166, %c0_167, %c0_168] : memref<2x8x32xf32, #tpu.memory_space<vmem>>, vector<1x8x32xf32>
    %730 = vector.shape_cast %729 : vector<1x8x32xf32> to vector<8x32xf32>
    %731 = vector.shape_cast %722 : vector<8x32xf32> to vector<1x8x32xf32>
    tpu.vector_store %arg5[%c1_166, %c0_167, %c0_168], %731 {strides = array<i32>} : memref<2x8x32xf32, #tpu.memory_space<vmem>>, vector<1x8x32xf32>,
    %c0_169 = arith.constant 0 : index
    %c0_170 = arith.constant 0 : index
    %c0_171 = arith.constant 0 : index
    %732 = vector.load %arg6[%c0_169, %c0_170, %c0_171] : memref<2x8x32xf32, #tpu.memory_space<vmem>>, vector<1x8x32xf32>
    %733 = vector.shape_cast %732 : vector<1x8x32xf32> to vector<8x32xf32>
    %734 = vector.shape_cast %656 : vector<8x32xf32> to vector<1x8x32xf32>
    tpu.vector_store %arg6[%c0_169, %c0_170, %c0_171], %734 {strides = array<i32>} : memref<2x8x32xf32, #tpu.memory_space<vmem>>, vector<1x8x32xf32>,
    %c1_172 = arith.constant 1 : index
    %c0_173 = arith.constant 0 : index
    %c0_174 = arith.constant 0 : index
    %735 = vector.load %arg6[%c1_172, %c0_173, %c0_174] : memref<2x8x32xf32, #tpu.memory_space<vmem>>, vector<1x8x32xf32>
    %736 = vector.shape_cast %735 : vector<1x8x32xf32> to vector<8x32xf32>
    %737 = vector.shape_cast %699 : vector<8x32xf32> to vector<1x8x32xf32>
    tpu.vector_store %arg6[%c1_172, %c0_173, %c0_174], %737 {strides = array<i32>} : memref<2x8x32xf32, #tpu.memory_space<vmem>>, vector<1x8x32xf32>,
    return
  }
}

</mosaic_0001>

<llo_original>
// kernel: slstm_layer_forward.1
$region0: #{slstm_layer_forward.1}
  #allocation0 [shape = 'u32[]', space=smem, size = 0x4, offset = 0x4, fixed_abs, tag = 'smem constant byte address 0x4 - core index']
  #allocation1 [shape = 'u32[72,128]{1,0:T(1,128)}', space=vmem, size = 0x9000, scoped, tag = 'internal scratch']
  #allocation2 [shape = 'f32[64,160]{1,0:T(8,128)}', space=vmem, size = 0x10000, scoped, tag = 'scratch operand']
  %s0 = inlined_call_operand.vmem [shape: f32[64,16], index: 0, kind: input, shape index: {}]
  %s1 = inlined_call_operand.vmem [shape: f32[16,160], index: 1, kind: input, shape index: {}]
  %s2 = inlined_call_operand.vmem [shape: bf16[3,32,128], index: 2, kind: input, shape index: {}]
  %s3 = inlined_call_operand.vmem [shape: f32[6,160], index: 3, kind: input, shape index: {}]
  %s4 = inlined_call_operand.hbm [shape: f32[8,8,32], index: 4, kind: output, shape index: {0}]
  %s5 = inlined_call_operand.hbm [shape: f32[2,8,32], index: 5, kind: output, shape index: {1}]
  %s6 = inlined_call_operand.hbm [shape: f32[2,8,32], index: 6, kind: output, shape index: {2}]
  %7 = xla_tuple %s4, %s5, %s6
  %s8 = sld [smem:[#allocation0]]
  $region42: #{slstm_layer_forward.1} parent=0
    _
  %s10 = ssub.s32 1, %s8
  %s11 = scalar_select 0, %s10, %s8
  $region1: #{slstm_layer_forward.1} parent=0
    #allocation3 [shape = 'u8[32768]{0}', space=vmem, size = 0x8000, scoped, tag = 'output window, operand 0, single buffered']
    #allocation4 [shape = 's32[1]{0}', space=sflag, size = 0x4, scoped, tag = 'scoped memory for slstm_layer_forward.1']
    #allocation5 [shape = 'u8[8192]{0}', space=vmem, size = 0x2000, scoped, tag = 'output window, operand 1, single buffered']
    #allocation6 [shape = 's32[1]{0}', space=sflag, size = 0x4, scoped, tag = 'scoped memory for slstm_layer_forward.1']
    #allocation7 [shape = 'u8[8192]{0}', space=vmem, size = 0x2000, scoped, tag = 'output window, operand 2, single buffered']
    %12 = vsyncpa [#allocation4], 0
    %13 = vsyncpa [#allocation6], 0
    // Predicated region
    $region2: #{slstm_layer_forward.1} parent=1 // pred_check
      _
    $region3: #{slstm_layer_forward.1} parent=1 // pred_check_branch
      %15 = sbr.rel (0) target = $region5
    $region4: #{slstm_layer_forward.1} parent=1 // pred_region
      _
    $region5: #{slstm_layer_forward.1} parent=1 // pred_fallthru
      _
    // Predicated region
    $region6: #{slstm_layer_forward.1} parent=1 // pred_check
      _
    $region7: #{slstm_layer_forward.1} parent=1 // pred_check_branch
      %17 = sbr.rel (0) target = $region9
    $region8: #{slstm_layer_forward.1} parent=1 // pred_region
      _
    $region9: #{slstm_layer_forward.1} parent=1 // pred_fallthru
      _
    // Predicated region
    $region10: #{slstm_layer_forward.1} parent=1 // pred_check
      _
    $region11: #{slstm_layer_forward.1} parent=1 // pred_check_branch
      %19 = sbr.rel (0) target = $region13
    $region12: #{slstm_layer_forward.1} parent=1 // pred_region
      _
    $region13: #{slstm_layer_forward.1} parent=1 // pred_fallthru
      _
    // Predicated region
    $region14: #{slstm_layer_forward.1} parent=1 // pred_check
      _
    $region15: #{slstm_layer_forward.1} parent=1 // pred_check_branch
      %21 = sbr.rel (0) target = $region17
    $region16: #{slstm_layer_forward.1} parent=1 // pred_region
      _
    $region17: #{slstm_layer_forward.1} parent=1 // pred_fallthru
      _
    %v23 = vld [vmem:[%s3] sm:$0x3f]
    %v24 = vld [vmem:[%s3 + $0x8] sm:$0x3f]
    %v25 = vld [vmem:[%s0] sm:$0xff]
    %v26 = vld [vmem:[%s0 + $0x8] sm:$0xff]
    %v27 = vld [vmem:[%s0 + $0x10] sm:$0xff]
    %v28 = vld [vmem:[%s0 + $0x18] sm:$0xff]
    %v29 = vld [vmem:[%s0 + $0x20] sm:$0xff]
    %v30 = vld [vmem:[%s0 + $0x28] sm:$0xff]
    %v31 = vld [vmem:[%s0 + $0x30] sm:$0xff]
    %v32 = vld [vmem:[%s0 + $0x38] sm:$0xff]
    %v33 = vld [vmem:[%s1] sm:$0xff]
    %v34 = vld [vmem:[%s1 + $0x8] sm:$0xff]
    %v35 = vld [vmem:[%s1 + $0x10] sm:$0xff]
    %v36 = vld [vmem:[%s1 + $0x18] sm:$0xff]
    %v37 = vperm.slane %v23, 0
    %v38 = vperm.slane %v24, 0
    %vm39 = vcmask 130048
    %v41 = vsel %vm39, %v25, 0
    %v44 = vsel %vm39, %v26, 0
    %v47 = vsel %vm39, %v27, 0
    %v50 = vsel %vm39, %v28, 0
    %v53 = vsel %vm39, %v29, 0
    %v56 = vsel %vm39, %v30, 0
    %v59 = vsel %vm39, %v31, 0
    %v62 = vsel %vm39, %v32, 0
    %64 = vmatpush.msra.mxu0 0.0
    %65 = vmatpush.msra.mxu0 0.0
    %66 = vmatpush.msra.mxu0 0.0
    %67 = vmatpush.msra.mxu0 0.0
    %68 = vmatpush.msra.mxu0 0.0
    %69 = vmatpush.msra.mxu0 0.0
    %70 = vmatpush.msra.mxu0 0.0
    %71 = vmatpush.msra.mxu0 0.0
    %72 = vmatpush.msra.mxu0 0.0
    %73 = vmatpush.msra.mxu0 0.0
    %74 = vmatpush.msra.mxu0 0.0
    %75 = vmatpush.msra.mxu0 0.0
    %76 = vmatpush.msra.mxu0 0.0
    %77 = vmatpush.msra.mxu0 0.0
    %78 = vmatpush.msra.mxu0 %v35
    %79 = vmatpush.msra.mxu0 %v33
    %80 = vmatmul.f32.gmra.mxu0 %v41
    %v81 = vpop.f32.mrf.mxu0
    %v82 = vadd.f32 %v37, %v81
    %83 = vmatmul.f32.gmra.mxu0 %v44
    %v84 = vpop.f32.mrf.mxu0
    %v85 = vadd.f32 %v37, %v84
    %86 = vmatmul.f32.gmra.mxu0 %v47
    %v87 = vpop.f32.mrf.mxu0
    %v88 = vadd.f32 %v37, %v87
    %89 = vmatmul.f32.gmra.mxu0 %v50
    %v90 = vpop.f32.mrf.mxu0
    %v91 = vadd.f32 %v37, %v90
    %92 = vmatmul.f32.gmra.mxu0 %v53
    %v93 = vpop.f32.mrf.mxu0
    %v94 = vadd.f32 %v37, %v93
    %95 = vmatmul.f32.gmra.mxu0 %v56
    %v96 = vpop.f32.mrf.mxu0
    %v97 = vadd.f32 %v37, %v96
    %98 = vmatmul.f32.gmra.mxu0 %v59
    %v99 = vpop.f32.mrf.mxu0
    %v100 = vadd.f32 %v37, %v99
    %101 = vmatmul.f32.gmra.mxu0 %v62
    %v102 = vpop.f32.mrf.mxu0
    %v103 = vadd.f32 %v37, %v102
    %104 = vdwg.mxu0
    %105 = vmatpush.msra.mxu0 0.0
    %106 = vmatpush.msra.mxu0 0.0
    %107 = vmatpush.msra.mxu0 0.0
    %108 = vmatpush.msra.mxu0 0.0
    %109 = vmatpush.msra.mxu0 0.0
    %110 = vmatpush.msra.mxu0 0.0
    %111 = vmatpush.msra.mxu0 0.0
    %112 = vmatpush.msra.mxu0 0.0
    %113 = vmatpush.msra.mxu0 0.0
    %114 = vmatpush.msra.mxu0 0.0
    %115 = vmatpush.msra.mxu0 0.0
    %116 = vmatpush.msra.mxu0 0.0
    %117 = vmatpush.msra.mxu0 0.0
    %118 = vmatpush.msra.mxu0 0.0
    %119 = vmatpush.msra.mxu0 %v36
    %120 = vmatpush.msra.mxu0 %v34
    %121 = vmatmul.f32.gmra.mxu0 %v41
    %v122 = vpop.f32.mrf.mxu0
    %v123 = vadd.f32 %v38, %v122
    %124 = vmatmul.f32.gmra.mxu0 %v44
    %v125 = vpop.f32.mrf.mxu0
    %v126 = vadd.f32 %v38, %v125
    %127 = vmatmul.f32.gmra.mxu0 %v47
    %v128 = vpop.f32.mrf.mxu0
    %v129 = vadd.f32 %v38, %v128
    %130 = vmatmul.f32.gmra.mxu0 %v50
    %v131 = vpop.f32.mrf.mxu0
    %v132 = vadd.f32 %v38, %v131
    %133 = vmatmul.f32.gmra.mxu0 %v53
    %v134 = vpop.f32.mrf.mxu0
    %v135 = vadd.f32 %v38, %v134
    %136 = vmatmul.f32.gmra.mxu0 %v56
    %v137 = vpop.f32.mrf.mxu0
    %v138 = vadd.f32 %v38, %v137
    %139 = vmatmul.f32.gmra.mxu0 %v59
    %v140 = vpop.f32.mrf.mxu0
    %v141 = vadd.f32 %v38, %v140
    %142 = vmatmul.f32.gmra.mxu0 %v62
    %v143 = vpop.f32.mrf.mxu0
    %v144 = vadd.f32 %v38, %v143
    %145 = vdwg.mxu0
    %146 = vst [vmem:[#allocation2] sm:$0xff] %v82
    %vm147 = vcmask 261120
    %148 = vst.msk [vmem:[#allocation2 + $0x8] sm:$0xff] %vm147, %v123
    %149 = vst [vmem:[#allocation2 + $0x10] sm:$0xff] %v85
    %150 = vst.msk [vmem:[#allocation2 + $0x18] sm:$0xff] %vm147, %v126
    %151 = vst [vmem:[#allocation2 + $0x20] sm:$0xff] %v88
    %152 = vst.msk [vmem:[#allocation2 + $0x28] sm:$0xff] %vm147, %v129
    %153 = vst [vmem:[#allocation2 + $0x30] sm:$0xff] %v91
    %154 = vst.msk [vmem:[#allocation2 + $0x38] sm:$0xff] %vm147, %v132
    %155 = vst [vmem:[#allocation2 + $0x40] sm:$0xff] %v94
    %156 = vst.msk [vmem:[#allocation2 + $0x48] sm:$0xff] %vm147, %v135
    %157 = vst [vmem:[#allocation2 + $0x50] sm:$0xff] %v97
    %158 = vst.msk [vmem:[#allocation2 + $0x58] sm:$0xff] %vm147, %v138
    %159 = vst [vmem:[#allocation2 + $0x60] sm:$0xff] %v100
    %160 = vst.msk [vmem:[#allocation2 + $0x68] sm:$0xff] %vm147, %v141
    %161 = vst [vmem:[#allocation2 + $0x70] sm:$0xff] %v103
    %162 = vst.msk [vmem:[#allocation2 + $0x78] sm:$0xff] %vm147, %v144
    %v163 = vld [vmem:[%s2] sm:$0xf]
    %v164 = vld [vmem:[%s2 + $0x4] sm:$0xf]
    %v165 = vld [vmem:[%s2 + $0x8] sm:$0xf]
    %v166 = vld [vmem:[%s2 + $0xc] sm:$0xf]
    %s167 = scalar_lea.vmem %s2, 16
    %v168 = vld [vmem:[%s167] sm:$0xf]
    %v169 = vld [vmem:[%s167 + $0x4] sm:$0xf]
    %v170 = vld [vmem:[%s167 + $0x8] sm:$0xf]
    %v171 = vld [vmem:[%s167 + $0xc] sm:$0xf]
    %s172 = scalar_lea.vmem %s2, 32
    %v173 = vld [vmem:[%s172] sm:$0xf]
    %v174 = vld [vmem:[%s172 + $0x4] sm:$0xf]
    %v175 = vld [vmem:[%s172 + $0x8] sm:$0xf]
    %v176 = vld [vmem:[%s172 + $0xc] sm:$0xf]
    %v177 = vperm.slane %v23, 1
    %v178 = vperm.slane %v23, 2
    %v179 = vperm.slane %v23, 3
    %v180 = vperm.slane %v23, 4
    %v181 = vperm.slane %v23, 5
    %v182 = vld [vmem:[#allocation2] sm:$0xff]
    %v183 = vld [vmem:[#allocation2 + $0x8] sm:$0xff]
    %v188 = vunpack.c.l.b16 %v163
    %v189 = vunpack.c.l.b16 %v164
    %v190 = vunpack.c.l.b16 %v165
    %v191 = vunpack.c.l.b16 %v166
    %v192 = vpack.c.b16 %v189, %v188
    %v193 = vpack.c.b16 %v191, %v190
    %v197 = vsel %vm147, 0, 0
    %199 = vmatpush.bf16.msra.mxu0 0
    %200 = vmatpush.bf16.msra.mxu0 0
    %201 = vmatpush.bf16.msra.mxu0 0
    %202 = vmatpush.bf16.msra.mxu0 0
    %203 = vmatpush.bf16.msra.mxu0 0
    %204 = vmatpush.bf16.msra.mxu0 0
    %205 = vmatpush.bf16.msra.mxu0 %v193
    %206 = vmatpush.bf16.msra.mxu0 %v192
    %207 = vmatmul.bf16.gmra.mxu0 %v197
    %v208 = vpop.f32.mrf.mxu0
    %v209 = vadd.f32 0.0, %v208
    %v210 = vpop.f32.mrf.mxu0
    %211 = vdwg.mxu0
    %v212 = vadd.f32 %v182, %v209
    %v213 = vxor.u32 %v212, 2147483648
    %v214 = vmul.f32 %v213, 1.442695
    %v215 = vpow.pop %v214
    %v216 = vadd.f32 %v215, 1.0
    %v217 = vrcp.pop %v216
    %v218 = vmul.f32 %v216, %v217
    %v219 = vsub.f32 1.0, %v218
    %v220 = vmul.f32 %v217, %v219
    %v221 = vadd.f32 %v217, %v220
    %vm222 = vweird.f32 %v216
    %vm223 = vweird.f32 %v217
    %vm224 = vmor %vm222, %vm223
    %v225 = vsel %vm224, %v217, %v221
    %v226 = vand.u32 2147483647, %v216
    %vm227 = vcmp.eq.f32.partialorder %v226, 8.507059e+37
    %v228 = vand.u32 %v216, 2147483648
    %v229 = vor.u32 1.1754944e-38, %v228
    %v230 = vsel %vm227, %v229, %v225
    %v231 = vmul.f32 1.0, %v230
    %v232 = vtanh.pop %v212
    %v233 = vmul.f32 %v231, 0.0
    %235 = vrot.lane.b32.xlu0 %v232, 64
    %v236 = vpop.permute.xlu0 %235
    %v238 = vmul.f32 %v231, %v236
    %240 = vrot.lane.b32.xlu0 %v238, 32
    %v241 = vpop.permute.xlu0 %240
    %v243 = vadd.f32 %v233, %v241
    %v244 = vtanh.pop %v243
    %246 = vrot.lane.b32.xlu0 %v244, 64
    %v247 = vpop.permute.xlu0 %246
    %v249 = vmul.f32 %v231, %v247
    %251 = vrot.lane.b32.xlu0 %v183, 96
    %v252 = vpop.permute.xlu0 %251
    %v254 = vadd.f32 %v249, %v252
    %256 = vrot.lane.b32.xlu0 %v254, 32
    %v257 = vpop.permute.xlu0 %256
    %v259 = vsel %vm147, %v257, 0.0
    %260 = vadd.xlane.f32.xlu0 %v259
    %v261 = vpop.xlane.xlu0 %260
    %v262 = vmul.f32 %v254, %v254
    %264 = vrot.lane.b32.xlu0 %v262, 32
    %v265 = vpop.permute.xlu0 %264
    %v267 = vsel %vm147, %v265, 0.0
    %268 = vadd.xlane.f32.xlu0 %v267
    %v269 = vpop.xlane.xlu0 %268
    %v270 = vmul.f32 %v261, 0.03125
    %v271 = vmul.f32 %v269, 0.03125
    %v272 = vmul.f32 %v270, %v270
    %v273 = vsub.f32 %v271, %v272
    %v274 = vsub.f32 %v254, %v270
    %v275 = vadd.f32 %v273, 1e-05
    %v276 = vrsqrt.pop %v275
    %v277 = vmul.f32 %v276, %v275
    %v278 = vmul.f32 %v277, %v276
    %v279 = vmul.f32 0.5, %v278
    %v280 = vsub.f32 1.5, %v279
    %v281 = vmul.f32 %v276, %v280
    %vm282 = vweird.f32 %v275
    %vm283 = vweird.f32 %v276
    %vm284 = vmor %vm282, %vm283
    %v285 = vsel %vm284, %v276, %v281
    %v286 = vmul.f32 %v274, %v285
    %288 = vrot.lane.b32.xlu0 %v178, 96
    %v289 = vpop.permute.xlu0 %288
    %v291 = vmul.f32 %v286, %v289
    %293 = vrot.lane.b32.xlu0 %v179, 96
    %v294 = vpop.permute.xlu0 %293
    %v296 = vadd.f32 %v291, %v294
    %v297 = vpack.c.bf16 %v296, %v296
    %v302 = vunpack.c.l.b16 %v173
    %v303 = vunpack.c.l.b16 %v174
    %v304 = vunpack.c.l.b16 %v175
    %v305 = vunpack.c.l.b16 %v176
    %v306 = vpack.c.b16 %v303, %v302
    %v307 = vpack.c.b16 %v305, %v304
    %310 = vmatpush.bf16.msra.mxu0 0
    %311 = vmatpush.bf16.msra.mxu0 0
    %312 = vmatpush.bf16.msra.mxu0 0
    %313 = vmatpush.bf16.msra.mxu0 0
    %314 = vmatpush.bf16.msra.mxu0 0
    %315 = vmatpush.bf16.msra.mxu0 0
    %316 = vmatpush.bf16.msra.mxu0 %v307
    %317 = vmatpush.bf16.msra.mxu0 %v306
    %318 = vmatmul.bf16.gmra.mxu0 %v197
    %v319 = vpop.f32.mrf.mxu0
    %v320 = vadd.f32 0.0, %v319
    %v321 = vpop.f32.mrf.mxu0
    %322 = vdwg.mxu0
    %324 = vrot.lane.b32.xlu0 %v297, 32
    %v325 = vpop.permute.xlu0 %324
    %v330 = vunpack.c.l.b16 %v168
    %v331 = vunpack.c.l.b16 %v169
    %v332 = vunpack.c.l.b16 %v170
    %v333 = vunpack.c.l.b16 %v171
    %v334 = vpack.c.b16 %v331, %v330
    %v335 = vpack.c.b16 %v333, %v332
    %v339 = vsel %vm147, %v325, 0
    %341 = vmatpush.bf16.msra.mxu0 0
    %342 = vmatpush.bf16.msra.mxu0 0
    %343 = vmatpush.bf16.msra.mxu0 0
    %344 = vmatpush.bf16.msra.mxu0 0
    %345 = vmatpush.bf16.msra.mxu0 0
    %346 = vmatpush.bf16.msra.mxu0 0
    %347 = vmatpush.bf16.msra.mxu0 %v335
    %348 = vmatpush.bf16.msra.mxu0 %v334
    %349 = vmatmul.bf16.gmra.mxu0 %v339
    %v350 = vpop.f32.mrf.mxu0
    %v351 = vadd.f32 %v320, %v350
    %v352 = vpop.f32.mrf.mxu0
    %353 = vdwg.mxu0
    %v354 = vadd.f32 %v351, %v177
    %v355 = vxor.u32 %v354, 2147483648
    %v356 = vmul.f32 %v355, 1.442695
    %v357 = vpow.pop %v356
    %v358 = vadd.f32 %v357, 1.0
    %v359 = vrcp.pop %v358
    %v360 = vmul.f32 %v358, %v359
    %v361 = vsub.f32 1.0, %v360
    %v362 = vmul.f32 %v359, %v361
    %v363 = vadd.f32 %v359, %v362
    %vm364 = vweird.f32 %v358
    %vm365 = vweird.f32 %v359
    %vm366 = vmor %vm364, %vm365
    %v367 = vsel %vm366, %v359, %v363
    %v368 = vand.u32 2147483647, %v358
    %vm369 = vcmp.eq.f32.partialorder %v368, 8.507059e+37
    %v370 = vand.u32 %v358, 2147483648
    %v371 = vor.u32 1.1754944e-38, %v370
    %v372 = vsel %vm369, %v371, %v367
    %v373 = vmul.f32 1.0, %v372
    %v374 = vtanh.pop %v354
    %v375 = vmul.f32 %v373, 0.0
    %377 = vrot.lane.b32.xlu0 %v374, 64
    %v378 = vpop.permute.xlu0 %377
    %v380 = vmul.f32 %v373, %v378
    %382 = vrot.lane.b32.xlu0 %v380, 32
    %v383 = vpop.permute.xlu0 %382
    %v385 = vadd.f32 %v375, %v383
    %v386 = vtanh.pop %v385
    %388 = vrot.lane.b32.xlu0 %v386, 64
    %v389 = vpop.permute.xlu0 %388
    %v391 = vmul.f32 %v373, %v389
    %v392 = vadd.f32 %v391, %v296
    %394 = vrot.lane.b32.xlu0 %v392, 32
    %v395 = vpop.permute.xlu0 %394
    %v397 = vsel %vm147, %v395, 0.0
    %398 = vadd.xlane.f32.xlu0 %v397
    %v399 = vpop.xlane.xlu0 %398
    %v400 = vmul.f32 %v392, %v392
    %402 = vrot.lane.b32.xlu0 %v400, 32
    %v403 = vpop.permute.xlu0 %402
    %v405 = vsel %vm147, %v403, 0.0
    %406 = vadd.xlane.f32.xlu0 %v405
    %v407 = vpop.xlane.xlu0 %406
    %v408 = vmul.f32 %v399, 0.03125
    %v409 = vmul.f32 %v407, 0.03125
    %v410 = vmul.f32 %v408, %v408
    %v411 = vsub.f32 %v409, %v410
    %v412 = vsub.f32 %v392, %v408
    %v413 = vadd.f32 %v411, 1e-05
    %v414 = vrsqrt.pop %v413
    %v415 = vmul.f32 %v414, %v413
    %v416 = vmul.f32 %v415, %v414
    %v417 = vmul.f32 0.5, %v416
    %v418 = vsub.f32 1.5, %v417
    %v419 = vmul.f32 %v414, %v418
    %vm420 = vweird.f32 %v413
    %vm421 = vweird.f32 %v414
    %vm422 = vmor %vm420, %vm421
    %v423 = vsel %vm422, %v414, %v419
    %v424 = vmul.f32 %v412, %v423
    %426 = vrot.lane.b32.xlu0 %v180, 96
    %v427 = vpop.permute.xlu0 %426
    %v429 = vmul.f32 %v424, %v427
    %431 = vrot.lane.b32.xlu0 %v181, 96
    %v432 = vpop.permute.xlu0 %431
    %v434 = vadd.f32 %v429, %v432
    %436 = vrot.lane.b32.xlu0 %v434, 32
    %v437 = vpop.permute.xlu0 %436
    %439 = vst.msk [vmem:[#allocation3] sm:$0xff] %vm147, %v437
    %v440 = vld [vmem:[#allocation2 + $0x10] sm:$0xff]
    %v441 = vld [vmem:[#allocation2 + $0x18] sm:$0xff]
    %442 = vmatpush.bf16.msra.mxu0 0
    %443 = vmatpush.bf16.msra.mxu0 0
    %444 = vmatpush.bf16.msra.mxu0 0
    %445 = vmatpush.bf16.msra.mxu0 0
    %446 = vmatpush.bf16.msra.mxu0 0
    %447 = vmatpush.bf16.msra.mxu0 0
    %448 = vmatpush.bf16.msra.mxu0 %v193
    %449 = vmatpush.bf16.msra.mxu0 %v192
    %450 = vmatmul.bf16.gmra.mxu0 %v339
    %v451 = vpop.f32.mrf.mxu0
    %v452 = vadd.f32 0.0, %v451
    %v453 = vpop.f32.mrf.mxu0
    %454 = vdwg.mxu0
    %v455 = vadd.f32 %v440, %v452
    %v456 = vxor.u32 %v455, 2147483648
    %v457 = vmul.f32 %v456, 1.442695
    %v458 = vpow.pop %v457
    %v459 = vadd.f32 %v458, 1.0
    %v460 = vrcp.pop %v459
    %v461 = vmul.f32 %v459, %v460
    %v462 = vsub.f32 1.0, %v461
    %v463 = vmul.f32 %v460, %v462
    %v464 = vadd.f32 %v460, %v463
    %vm465 = vweird.f32 %v459
    %vm466 = vweird.f32 %v460
    %vm467 = vmor %vm465, %vm466
    %v468 = vsel %vm467, %v460, %v464
    %v469 = vand.u32 2147483647, %v459
    %vm470 = vcmp.eq.f32.partialorder %v469, 8.507059e+37
    %v471 = vand.u32 %v459, 2147483648
    %v472 = vor.u32 1.1754944e-38, %v471
    %v473 = vsel %vm470, %v472, %v468
    %v474 = vmul.f32 1.0, %v473
    %v475 = vtanh.pop %v455
    %v476 = vmul.f32 %v474, %v243
    %478 = vrot.lane.b32.xlu0 %v475, 64
    %v479 = vpop.permute.xlu0 %478
    %v481 = vmul.f32 %v474, %v479
    %483 = vrot.lane.b32.xlu0 %v481, 32
    %v484 = vpop.permute.xlu0 %483
    %v486 = vadd.f32 %v476, %v484
    %v487 = vtanh.pop %v486
    %489 = vrot.lane.b32.xlu0 %v487, 64
    %v490 = vpop.permute.xlu0 %489
    %v492 = vmul.f32 %v474, %v490
    %494 = vrot.lane.b32.xlu0 %v441, 96
    %v495 = vpop.permute.xlu0 %494
    %v497 = vadd.f32 %v492, %v495
    %499 = vrot.lane.b32.xlu0 %v497, 32
    %v500 = vpop.permute.xlu0 %499
    %v502 = vsel %vm147, %v500, 0.0
    %503 = vadd.xlane.f32.xlu0 %v502
    %v504 = vpop.xlane.xlu0 %503
    %v505 = vmul.f32 %v497, %v497
    %507 = vrot.lane.b32.xlu0 %v505, 32
    %v508 = vpop.permute.xlu0 %507
    %v510 = vsel %vm147, %v508, 0.0
    %511 = vadd.xlane.f32.xlu0 %v510
    %v512 = vpop.xlane.xlu0 %511
    %v513 = vmul.f32 %v504, 0.03125
    %v514 = vmul.f32 %v512, 0.03125
    %v515 = vmul.f32 %v513, %v513
    %v516 = vsub.f32 %v514, %v515
    %v517 = vsub.f32 %v497, %v513
    %v518 = vadd.f32 %v516, 1e-05
    %v519 = vrsqrt.pop %v518
    %v520 = vmul.f32 %v519, %v518
    %v521 = vmul.f32 %v520, %v519
    %v522 = vmul.f32 0.5, %v521
    %v523 = vsub.f32 1.5, %v522
    %v524 = vmul.f32 %v519, %v523
    %vm525 = vweird.f32 %v518
    %vm526 = vweird.f32 %v519
    %vm527 = vmor %vm525, %vm526
    %v528 = vsel %vm527, %v519, %v524
    %v529 = vmul.f32 %v517, %v528
    %v530 = vmul.f32 %v529, %v289
    %v531 = vadd.f32 %v530, %v294
    %v532 = vpack.c.bf16 %v531, %v531
    %v533 = vpack.c.bf16 %v434, %v434
    %535 = vrot.lane.b32.xlu0 %v533, 32
    %v536 = vpop.permute.xlu0 %535
    %v538 = vsel %vm147, %v536, 0
    %540 = vmatpush.bf16.msra.mxu0 0
    %541 = vmatpush.bf16.msra.mxu0 0
    %542 = vmatpush.bf16.msra.mxu0 0
    %543 = vmatpush.bf16.msra.mxu0 0
    %544 = vmatpush.bf16.msra.mxu0 0
    %545 = vmatpush.bf16.msra.mxu0 0
    %546 = vmatpush.bf16.msra.mxu0 %v307
    %547 = vmatpush.bf16.msra.mxu0 %v306
    %548 = vmatmul.bf16.gmra.mxu0 %v538
    %v549 = vpop.f32.mrf.mxu0
    %v550 = vadd.f32 0.0, %v549
    %v551 = vpop.f32.mrf.mxu0
    %552 = vdwg.mxu0
    %554 = vrot.lane.b32.xlu0 %v532, 32
    %v555 = vpop.permute.xlu0 %554
    %v557 = vsel %vm147, %v555, 0
    %559 = vmatpush.bf16.msra.mxu0 0
    %560 = vmatpush.bf16.msra.mxu0 0
    %561 = vmatpush.bf16.msra.mxu0 0
    %562 = vmatpush.bf16.msra.mxu0 0
    %563 = vmatpush.bf16.msra.mxu0 0
    %564 = vmatpush.bf16.msra.mxu0 0
    %565 = vmatpush.bf16.msra.mxu0 %v335
    %566 = vmatpush.bf16.msra.mxu0 %v334
    %567 = vmatmul.bf16.gmra.mxu0 %v557
    %v568 = vpop.f32.mrf.mxu0
    %v569 = vadd.f32 %v550, %v568
    %v570 = vpop.f32.mrf.mxu0
    %571 = vdwg.mxu0
    %v572 = vadd.f32 %v569, %v177
    %v573 = vxor.u32 %v572, 2147483648
    %v574 = vmul.f32 %v573, 1.442695
    %v575 = vpow.pop %v574
    %v576 = vadd.f32 %v575, 1.0
    %v577 = vrcp.pop %v576
    %v578 = vmul.f32 %v576, %v577
    %v579 = vsub.f32 1.0, %v578
    %v580 = vmul.f32 %v577, %v579
    %v581 = vadd.f32 %v577, %v580
    %vm582 = vweird.f32 %v576
    %vm583 = vweird.f32 %v577
    %vm584 = vmor %vm582, %vm583
    %v585 = vsel %vm584, %v577, %v581
    %v586 = vand.u32 2147483647, %v576
    %vm587 = vcmp.eq.f32.partialorder %v586, 8.507059e+37
    %v588 = vand.u32 %v576, 2147483648
    %v589 = vor.u32 1.1754944e-38, %v588
    %v590 = vsel %vm587, %v589, %v585
    %v591 = vmul.f32 1.0, %v590
    %v592 = vtanh.pop %v572
    %v593 = vmul.f32 %v591, %v385
    %595 = vrot.lane.b32.xlu0 %v592, 64
    %v596 = vpop.permute.xlu0 %595
    %v598 = vmul.f32 %v591, %v596
    %600 = vrot.lane.b32.xlu0 %v598, 32
    %v601 = vpop.permute.xlu0 %600
    %v603 = vadd.f32 %v593, %v601
    %v604 = vtanh.pop %v603
    %606 = vrot.lane.b32.xlu0 %v604, 64
    %v607 = vpop.permute.xlu0 %606
    %v609 = vmul.f32 %v591, %v607
    %v610 = vadd.f32 %v609, %v531
    %612 = vrot.lane.b32.xlu0 %v610, 32
    %v613 = vpop.permute.xlu0 %612
    %v615 = vsel %vm147, %v613, 0.0
    %616 = vadd.xlane.f32.xlu0 %v615
    %v617 = vpop.xlane.xlu0 %616
    %v618 = vmul.f32 %v610, %v610
    %620 = vrot.lane.b32.xlu0 %v618, 32
    %v621 = vpop.permute.xlu0 %620
    %v623 = vsel %vm147, %v621, 0.0
    %624 = vadd.xlane.f32.xlu0 %v623
    %v625 = vpop.xlane.xlu0 %624
    %v626 = vmul.f32 %v617, 0.03125
    %v627 = vmul.f32 %v625, 0.03125
    %v628 = vmul.f32 %v626, %v626
    %v629 = vsub.f32 %v627, %v628
    %v630 = vsub.f32 %v610, %v626
    %v631 = vadd.f32 %v629, 1e-05
    %v632 = vrsqrt.pop %v631
    %v633 = vmul.f32 %v632, %v631
    %v634 = vmul.f32 %v633, %v632
    %v635 = vmul.f32 0.5, %v634
    %v636 = vsub.f32 1.5, %v635
    %v637 = vmul.f32 %v632, %v636
    %vm638 = vweird.f32 %v631
    %vm639 = vweird.f32 %v632
    %vm640 = vmor %vm638, %vm639
    %v641 = vsel %vm640, %v632, %v637
    %v642 = vmul.f32 %v630, %v641
    %v643 = vmul.f32 %v642, %v427
    %v644 = vadd.f32 %v643, %v432
    %646 = vrot.lane.b32.xlu0 %v644, 32
    %v647 = vpop.permute.xlu0 %646
    %s649 = scalar_lea.vmem [#allocation3], 8
    %650 = vst.msk [vmem:[%s649] sm:$0xff] %vm147, %v647
    %v651 = vld [vmem:[#allocation2 + $0x20] sm:$0xff]
    %v652 = vld [vmem:[#allocation2 + $0x28] sm:$0xff]
    %653 = vmatpush.bf16.msra.mxu0 0
    %654 = vmatpush.bf16.msra.mxu0 0
    %655 = vmatpush.bf16.msra.mxu0 0
    %656 = vmatpush.bf16.msra.mxu0 0
    %657 = vmatpush.bf16.msra.mxu0 0
    %658 = vmatpush.bf16.msra.mxu0 0
    %659 = vmatpush.bf16.msra.mxu0 %v193
    %660 = vmatpush.bf16.msra.mxu0 %v192
    %661 = vmatmul.bf16.gmra.mxu0 %v557
    %v662 = vpop.f32.mrf.mxu0
    %v663 = vadd.f32 0.0, %v662
    %v664 = vpop.f32.mrf.mxu0
    %665 = vdwg.mxu0
    %v666 = vadd.f32 %v651, %v663
    %v667 = vxor.u32 %v666, 2147483648
    %v668 = vmul.f32 %v667, 1.442695
    %v669 = vpow.pop %v668
    %v670 = vadd.f32 %v669, 1.0
    %v671 = vrcp.pop %v670
    %v672 = vmul.f32 %v670, %v671
    %v673 = vsub.f32 1.0, %v672
    %v674 = vmul.f32 %v671, %v673
    %v675 = vadd.f32 %v671, %v674
    %vm676 = vweird.f32 %v670
    %vm677 = vweird.f32 %v671
    %vm678 = vmor %vm676, %vm677
    %v679 = vsel %vm678, %v671, %v675
    %v680 = vand.u32 2147483647, %v670
    %vm681 = vcmp.eq.f32.partialorder %v680, 8.507059e+37
    %v682 = vand.u32 %v670, 2147483648
    %v683 = vor.u32 1.1754944e-38, %v682
    %v684 = vsel %vm681, %v683, %v679
    %v685 = vmul.f32 1.0, %v684
    %v686 = vtanh.pop %v666
    %v687 = vmul.f32 %v685, %v486
    %689 = vrot.lane.b32.xlu0 %v686, 64
    %v690 = vpop.permute.xlu0 %689
    %v692 = vmul.f32 %v685, %v690
    %694 = vrot.lane.b32.xlu0 %v692, 32
    %v695 = vpop.permute.xlu0 %694
    %v697 = vadd.f32 %v687, %v695
    %v698 = vtanh.pop %v697
    %700 = vrot.lane.b32.xlu0 %v698, 64
    %v701 = vpop.permute.xlu0 %700
    %v703 = vmul.f32 %v685, %v701
    %705 = vrot.lane.b32.xlu0 %v652, 96
    %v706 = vpop.permute.xlu0 %705
    %v708 = vadd.f32 %v703, %v706
    %710 = vrot.lane.b32.xlu0 %v708, 32
    %v711 = vpop.permute.xlu0 %710
    %v713 = vsel %vm147, %v711, 0.0
    %714 = vadd.xlane.f32.xlu0 %v713
    %v715 = vpop.xlane.xlu0 %714
    %v716 = vmul.f32 %v708, %v708
    %718 = vrot.lane.b32.xlu0 %v716, 32
    %v719 = vpop.permute.xlu0 %718
    %v721 = vsel %vm147, %v719, 0.0
    %722 = vadd.xlane.f32.xlu0 %v721
    %v723 = vpop.xlane.xlu0 %722
    %v724 = vmul.f32 %v715, 0.03125
    %v725 = vmul.f32 %v723, 0.03125
    %v726 = vmul.f32 %v724, %v724
    %v727 = vsub.f32 %v725, %v726
    %v728 = vsub.f32 %v708, %v724
    %v729 = vadd.f32 %v727, 1e-05
    %v730 = vrsqrt.pop %v729
    %v731 = vmul.f32 %v730, %v729
    %v732 = vmul.f32 %v731, %v730
    %v733 = vmul.f32 0.5, %v732
    %v734 = vsub.f32 1.5, %v733
    %v735 = vmul.f32 %v730, %v734
    %vm736 = vweird.f32 %v729
    %vm737 = vweird.f32 %v730
    %vm738 = vmor %vm736, %vm737
    %v739 = vsel %vm738, %v730, %v735
    %v740 = vmul.f32 %v728, %v739
    %v741 = vmul.f32 %v740, %v289
    %v742 = vadd.f32 %v741, %v294
    %v743 = vpack.c.bf16 %v742, %v742
    %v744 = vpack.c.bf16 %v644, %v644
    %746 = vrot.lane.b32.xlu0 %v744, 32
    %v747 = vpop.permute.xlu0 %746
    %v749 = vsel %vm147, %v747, 0
    %751 = vmatpush.bf16.msra.mxu0 0
    %752 = vmatpush.bf16.msra.mxu0 0
    %753 = vmatpush.bf16.msra.mxu0 0
    %754 = vmatpush.bf16.msra.mxu0 0
    %755 = vmatpush.bf16.msra.mxu0 0
    %756 = vmatpush.bf16.msra.mxu0 0
    %757 = vmatpush.bf16.msra.mxu0 %v307
    %758 = vmatpush.bf16.msra.mxu0 %v306
    %759 = vmatmul.bf16.gmra.mxu0 %v749
    %v760 = vpop.f32.mrf.mxu0
    %v761 = vadd.f32 0.0, %v760
    %v762 = vpop.f32.mrf.mxu0
    %763 = vdwg.mxu0
    %765 = vrot.lane.b32.xlu0 %v743, 32
    %v766 = vpop.permute.xlu0 %765
    %v768 = vsel %vm147, %v766, 0
    %770 = vmatpush.bf16.msra.mxu0 0
    %771 = vmatpush.bf16.msra.mxu0 0
    %772 = vmatpush.bf16.msra.mxu0 0
    %773 = vmatpush.bf16.msra.mxu0 0
    %774 = vmatpush.bf16.msra.mxu0 0
    %775 = vmatpush.bf16.msra.mxu0 0
    %776 = vmatpush.bf16.msra.mxu0 %v335
    %777 = vmatpush.bf16.msra.mxu0 %v334
    %778 = vmatmul.bf16.gmra.mxu0 %v768
    %v779 = vpop.f32.mrf.mxu0
    %v780 = vadd.f32 %v761, %v779
    %v781 = vpop.f32.mrf.mxu0
    %782 = vdwg.mxu0
    %v783 = vadd.f32 %v780, %v177
    %v784 = vxor.u32 %v783, 2147483648
    %v785 = vmul.f32 %v784, 1.442695
    %v786 = vpow.pop %v785
    %v787 = vadd.f32 %v786, 1.0
    %v788 = vrcp.pop %v787
    %v789 = vmul.f32 %v787, %v788
    %v790 = vsub.f32 1.0, %v789
    %v791 = vmul.f32 %v788, %v790
    %v792 = vadd.f32 %v788, %v791
    %vm793 = vweird.f32 %v787
    %vm794 = vweird.f32 %v788
    %vm795 = vmor %vm793, %vm794
    %v796 = vsel %vm795, %v788, %v792
    %v797 = vand.u32 2147483647, %v787
    %vm798 = vcmp.eq.f32.partialorder %v797, 8.507059e+37
    %v799 = vand.u32 %v787, 2147483648
    %v800 = vor.u32 1.1754944e-38, %v799
    %v801 = vsel %vm798, %v800, %v796
    %v802 = vmul.f32 1.0, %v801
    %v803 = vtanh.pop %v783
    %v804 = vmul.f32 %v802, %v603
    %806 = vrot.lane.b32.xlu0 %v803, 64
    %v807 = vpop.permute.xlu0 %806
    %v809 = vmul.f32 %v802, %v807
    %811 = vrot.lane.b32.xlu0 %v809, 32
    %v812 = vpop.permute.xlu0 %811
    %v814 = vadd.f32 %v804, %v812
    %v815 = vtanh.pop %v814
    %817 = vrot.lane.b32.xlu0 %v815, 64
    %v818 = vpop.permute.xlu0 %817
    %v820 = vmul.f32 %v802, %v818
    %v821 = vadd.f32 %v820, %v742
    %823 = vrot.lane.b32.xlu0 %v821, 32
    %v824 = vpop.permute.xlu0 %823
    %v826 = vsel %vm147, %v824, 0.0
    %827 = vadd.xlane.f32.xlu0 %v826
    %v828 = vpop.xlane.xlu0 %827
    %v829 = vmul.f32 %v821, %v821
    %831 = vrot.lane.b32.xlu0 %v829, 32
    %v832 = vpop.permute.xlu0 %831
    %v834 = vsel %vm147, %v832, 0.0
    %835 = vadd.xlane.f32.xlu0 %v834
    %v836 = vpop.xlane.xlu0 %835
    %v837 = vmul.f32 %v828, 0.03125
    %v838 = vmul.f32 %v836, 0.03125
    %v839 = vmul.f32 %v837, %v837
    %v840 = vsub.f32 %v838, %v839
    %v841 = vsub.f32 %v821, %v837
    %v842 = vadd.f32 %v840, 1e-05
    %v843 = vrsqrt.pop %v842
    %v844 = vmul.f32 %v843, %v842
    %v845 = vmul.f32 %v844, %v843
    %v846 = vmul.f32 0.5, %v845
    %v847 = vsub.f32 1.5, %v846
    %v848 = vmul.f32 %v843, %v847
    %vm849 = vweird.f32 %v842
    %vm850 = vweird.f32 %v843
    %vm851 = vmor %vm849, %vm850
    %v852 = vsel %vm851, %v843, %v848
    %v853 = vmul.f32 %v841, %v852
    %v854 = vmul.f32 %v853, %v427
    %v855 = vadd.f32 %v854, %v432
    %857 = vrot.lane.b32.xlu0 %v855, 32
    %v858 = vpop.permute.xlu0 %857
    %s860 = scalar_lea.vmem [#allocation3], 16
    %861 = vst.msk [vmem:[%s860] sm:$0xff] %vm147, %v858
    %v862 = vld [vmem:[#allocation2 + $0x30] sm:$0xff]
    %v863 = vld [vmem:[#allocation2 + $0x38] sm:$0xff]
    %864 = vmatpush.bf16.msra.mxu0 0
    %865 = vmatpush.bf16.msra.mxu0 0
    %866 = vmatpush.bf16.msra.mxu0 0
    %867 = vmatpush.bf16.msra.mxu0 0
    %868 = vmatpush.bf16.msra.mxu0 0
    %869 = vmatpush.bf16.msra.mxu0 0
    %870 = vmatpush.bf16.msra.mxu0 %v193
    %871 = vmatpush.bf16.msra.mxu0 %v192
    %872 = vmatmul.bf16.gmra.mxu0 %v768
    %v873 = vpop.f32.mrf.mxu0
    %v874 = vadd.f32 0.0, %v873
    %v875 = vpop.f32.mrf.mxu0
    %876 = vdwg.mxu0
    %v877 = vadd.f32 %v862, %v874
    %v878 = vxor.u32 %v877, 2147483648
    %v879 = vmul.f32 %v878, 1.442695
    %v880 = vpow.pop %v879
    %v881 = vadd.f32 %v880, 1.0
    %v882 = vrcp.pop %v881
    %v883 = vmul.f32 %v881, %v882
    %v884 = vsub.f32 1.0, %v883
    %v885 = vmul.f32 %v882, %v884
    %v886 = vadd.f32 %v882, %v885
    %vm887 = vweird.f32 %v881
    %vm888 = vweird.f32 %v882
    %vm889 = vmor %vm887, %vm888
    %v890 = vsel %vm889, %v882, %v886
    %v891 = vand.u32 2147483647, %v881
    %vm892 = vcmp.eq.f32.partialorder %v891, 8.507059e+37
    %v893 = vand.u32 %v881, 2147483648
    %v894 = vor.u32 1.1754944e-38, %v893
    %v895 = vsel %vm892, %v894, %v890
    %v896 = vmul.f32 1.0, %v895
    %v897 = vtanh.pop %v877
    %v898 = vmul.f32 %v896, %v697
    %900 = vrot.lane.b32.xlu0 %v897, 64
    %v901 = vpop.permute.xlu0 %900
    %v903 = vmul.f32 %v896, %v901
    %905 = vrot.lane.b32.xlu0 %v903, 32
    %v906 = vpop.permute.xlu0 %905
    %v908 = vadd.f32 %v898, %v906
    %v909 = vtanh.pop %v908
    %911 = vrot.lane.b32.xlu0 %v909, 64
    %v912 = vpop.permute.xlu0 %911
    %v914 = vmul.f32 %v896, %v912
    %916 = vrot.lane.b32.xlu0 %v863, 96
    %v917 = vpop.permute.xlu0 %916
    %v919 = vadd.f32 %v914, %v917
    %921 = vrot.lane.b32.xlu0 %v919, 32
    %v922 = vpop.permute.xlu0 %921
    %v924 = vsel %vm147, %v922, 0.0
    %925 = vadd.xlane.f32.xlu0 %v924
    %v926 = vpop.xlane.xlu0 %925
    %v927 = vmul.f32 %v919, %v919
    %929 = vrot.lane.b32.xlu0 %v927, 32
    %v930 = vpop.permute.xlu0 %929
    %v932 = vsel %vm147, %v930, 0.0
    %933 = vadd.xlane.f32.xlu0 %v932
    %v934 = vpop.xlane.xlu0 %933
    %v935 = vmul.f32 %v926, 0.03125
    %v936 = vmul.f32 %v934, 0.03125
    %v937 = vmul.f32 %v935, %v935
    %v938 = vsub.f32 %v936, %v937
    %v939 = vsub.f32 %v919, %v935
    %v940 = vadd.f32 %v938, 1e-05
    %v941 = vrsqrt.pop %v940
    %v942 = vmul.f32 %v941, %v940
    %v943 = vmul.f32 %v942, %v941
    %v944 = vmul.f32 0.5, %v943
    %v945 = vsub.f32 1.5, %v944
    %v946 = vmul.f32 %v941, %v945
    %vm947 = vweird.f32 %v940
    %vm948 = vweird.f32 %v941
    %vm949 = vmor %vm947, %vm948
    %v950 = vsel %vm949, %v941, %v946
    %v951 = vmul.f32 %v939, %v950
    %v952 = vmul.f32 %v951, %v289
    %v953 = vadd.f32 %v952, %v294
    %v954 = vpack.c.bf16 %v953, %v953
    %v955 = vpack.c.bf16 %v855, %v855
    %957 = vrot.lane.b32.xlu0 %v955, 32
    %v958 = vpop.permute.xlu0 %957
    %v960 = vsel %vm147, %v958, 0
    %962 = vmatpush.bf16.msra.mxu0 0
    %963 = vmatpush.bf16.msra.mxu0 0
    %964 = vmatpush.bf16.msra.mxu0 0
    %965 = vmatpush.bf16.msra.mxu0 0
    %966 = vmatpush.bf16.msra.mxu0 0
    %967 = vmatpush.bf16.msra.mxu0 0
    %968 = vmatpush.bf16.msra.mxu0 %v307
    %969 = vmatpush.bf16.msra.mxu0 %v306
    %970 = vmatmul.bf16.gmra.mxu0 %v960
    %v971 = vpop.f32.mrf.mxu0
    %v972 = vadd.f32 0.0, %v971
    %v973 = vpop.f32.mrf.mxu0
    %974 = vdwg.mxu0
    %976 = vrot.lane.b32.xlu0 %v954, 32
    %v977 = vpop.permute.xlu0 %976
    %v979 = vsel %vm147, %v977, 0
    %981 = vmatpush.bf16.msra.mxu0 0
    %982 = vmatpush.bf16.msra.mxu0 0
    %983 = vmatpush.bf16.msra.mxu0 0
    %984 = vmatpush.bf16.msra.mxu0 0
    %985 = vmatpush.bf16.msra.mxu0 0
    %986 = vmatpush.bf16.msra.mxu0 0
    %987 = vmatpush.bf16.msra.mxu0 %v335
    %988 = vmatpush.bf16.msra.mxu0 %v334
    %989 = vmatmul.bf16.gmra.mxu0 %v979
    %v990 = vpop.f32.mrf.mxu0
    %v991 = vadd.f32 %v972, %v990
    %v992 = vpop.f32.mrf.mxu0
    %993 = vdwg.mxu0
    %v994 = vadd.f32 %v991, %v177
    %v995 = vxor.u32 %v994, 2147483648
    %v996 = vmul.f32 %v995, 1.442695
    %v997 = vpow.pop %v996
    %v998 = vadd.f32 %v997, 1.0
    %v999 = vrcp.pop %v998
    %v1000 = vmul.f32 %v998, %v999
    %v1001 = vsub.f32 1.0, %v1000
    %v1002 = vmul.f32 %v999, %v1001
    %v1003 = vadd.f32 %v999, %v1002
    %vm1004 = vweird.f32 %v998
    %vm1005 = vweird.f32 %v999
    %vm1006 = vmor %vm1004, %vm1005
    %v1007 = vsel %vm1006, %v999, %v1003
    %v1008 = vand.u32 2147483647, %v998
    %vm1009 = vcmp.eq.f32.partialorder %v1008, 8.507059e+37
    %v1010 = vand.u32 %v998, 2147483648
    %v1011 = vor.u32 1.1754944e-38, %v1010
    %v1012 = vsel %vm1009, %v1011, %v1007
    %v1013 = vmul.f32 1.0, %v1012
    %v1014 = vtanh.pop %v994
    %v1015 = vmul.f32 %v1013, %v814
    %1017 = vrot.lane.b32.xlu0 %v1014, 64
    %v1018 = vpop.permute.xlu0 %1017
    %v1020 = vmul.f32 %v1013, %v1018
    %1022 = vrot.lane.b32.xlu0 %v1020, 32
    %v1023 = vpop.permute.xlu0 %1022
    %v1025 = vadd.f32 %v1015, %v1023
    %v1026 = vtanh.pop %v1025
    %1028 = vrot.lane.b32.xlu0 %v1026, 64
    %v1029 = vpop.permute.xlu0 %1028
    %v1031 = vmul.f32 %v1013, %v1029
    %v1032 = vadd.f32 %v1031, %v953
    %1034 = vrot.lane.b32.xlu0 %v1032, 32
    %v1035 = vpop.permute.xlu0 %1034
    %v1037 = vsel %vm147, %v1035, 0.0
    %1038 = vadd.xlane.f32.xlu0 %v1037
    %v1039 = vpop.xlane.xlu0 %1038
    %v1040 = vmul.f32 %v1032, %v1032
    %1042 = vrot.lane.b32.xlu0 %v1040, 32
    %v1043 = vpop.permute.xlu0 %1042
    %v1045 = vsel %vm147, %v1043, 0.0
    %1046 = vadd.xlane.f32.xlu0 %v1045
    %v1047 = vpop.xlane.xlu0 %1046
    %v1048 = vmul.f32 %v1039, 0.03125
    %v1049 = vmul.f32 %v1047, 0.03125
    %v1050 = vmul.f32 %v1048, %v1048
    %v1051 = vsub.f32 %v1049, %v1050
    %v1052 = vsub.f32 %v1032, %v1048
    %v1053 = vadd.f32 %v1051, 1e-05
    %v1054 = vrsqrt.pop %v1053
    %v1055 = vmul.f32 %v1054, %v1053
    %v1056 = vmul.f32 %v1055, %v1054
    %v1057 = vmul.f32 0.5, %v1056
    %v1058 = vsub.f32 1.5, %v1057
    %v1059 = vmul.f32 %v1054, %v1058
    %vm1060 = vweird.f32 %v1053
    %vm1061 = vweird.f32 %v1054
    %vm1062 = vmor %vm1060, %vm1061
    %v1063 = vsel %vm1062, %v1054, %v1059
    %v1064 = vmul.f32 %v1052, %v1063
    %v1065 = vmul.f32 %v1064, %v427
    %v1066 = vadd.f32 %v1065, %v432
    %1068 = vrot.lane.b32.xlu0 %v1066, 32
    %v1069 = vpop.permute.xlu0 %1068
    %s1071 = scalar_lea.vmem [#allocation3], 24
    %1072 = vst.msk [vmem:[%s1071] sm:$0xff] %vm147, %v1069
    %v1073 = vld [vmem:[#allocation2 + $0x40] sm:$0xff]
    %v1074 = vld [vmem:[#allocation2 + $0x48] sm:$0xff]
    %1075 = vmatpush.bf16.msra.mxu0 0
    %1076 = vmatpush.bf16.msra.mxu0 0
    %1077 = vmatpush.bf16.msra.mxu0 0
    %1078 = vmatpush.bf16.msra.mxu0 0
    %1079 = vmatpush.bf16.msra.mxu0 0
    %1080 = vmatpush.bf16.msra.mxu0 0
    %1081 = vmatpush.bf16.msra.mxu0 %v193
    %1082 = vmatpush.bf16.msra.mxu0 %v192
    %1083 = vmatmul.bf16.gmra.mxu0 %v979
    %v1084 = vpop.f32.mrf.mxu0
    %v1085 = vadd.f32 0.0, %v1084
    %v1086 = vpop.f32.mrf.mxu0
    %1087 = vdwg.mxu0
    %v1088 = vadd.f32 %v1073, %v1085
    %v1089 = vxor.u32 %v1088, 2147483648
    %v1090 = vmul.f32 %v1089, 1.442695
    %v1091 = vpow.pop %v1090
    %v1092 = vadd.f32 %v1091, 1.0
    %v1093 = vrcp.pop %v1092
    %v1094 = vmul.f32 %v1092, %v1093
    %v1095 = vsub.f32 1.0, %v1094
    %v1096 = vmul.f32 %v1093, %v1095
    %v1097 = vadd.f32 %v1093, %v1096
    %vm1098 = vweird.f32 %v1092
    %vm1099 = vweird.f32 %v1093
    %vm1100 = vmor %vm1098, %vm1099
    %v1101 = vsel %vm1100, %v1093, %v1097
    %v1102 = vand.u32 2147483647, %v1092
    %vm1103 = vcmp.eq.f32.partialorder %v1102, 8.507059e+37
    %v1104 = vand.u32 %v1092, 2147483648
    %v1105 = vor.u32 1.1754944e-38, %v1104
    %v1106 = vsel %vm1103, %v1105, %v1101
    %v1107 = vmul.f32 1.0, %v1106
    %v1108 = vtanh.pop %v1088
    %v1109 = vmul.f32 %v1107, %v908
    %1111 = vrot.lane.b32.xlu0 %v1108, 64
    %v1112 = vpop.permute.xlu0 %1111
    %v1114 = vmul.f32 %v1107, %v1112
    %1116 = vrot.lane.b32.xlu0 %v1114, 32
    %v1117 = vpop.permute.xlu0 %1116
    %v1119 = vadd.f32 %v1109, %v1117
    %v1120 = vtanh.pop %v1119
    %1122 = vrot.lane.b32.xlu0 %v1120, 64
    %v1123 = vpop.permute.xlu0 %1122
    %v1125 = vmul.f32 %v1107, %v1123
    %1127 = vrot.lane.b32.xlu0 %v1074, 96
    %v1128 = vpop.permute.xlu0 %1127
    %v1130 = vadd.f32 %v1125, %v1128
    %1132 = vrot.lane.b32.xlu0 %v1130, 32
    %v1133 = vpop.permute.xlu0 %1132
    %v1135 = vsel %vm147, %v1133, 0.0
    %1136 = vadd.xlane.f32.xlu0 %v1135
    %v1137 = vpop.xlane.xlu0 %1136
    %v1138 = vmul.f32 %v1130, %v1130
    %1140 = vrot.lane.b32.xlu0 %v1138, 32
    %v1141 = vpop.permute.xlu0 %1140
    %v1143 = vsel %vm147, %v1141, 0.0
    %1144 = vadd.xlane.f32.xlu0 %v1143
    %v1145 = vpop.xlane.xlu0 %1144
    %v1146 = vmul.f32 %v1137, 0.03125
    %v1147 = vmul.f32 %v1145, 0.03125
    %v1148 = vmul.f32 %v1146, %v1146
    %v1149 = vsub.f32 %v1147, %v1148
    %v1150 = vsub.f32 %v1130, %v1146
    %v1151 = vadd.f32 %v1149, 1e-05
    %v1152 = vrsqrt.pop %v1151
    %v1153 = vmul.f32 %v1152, %v1151
    %v1154 = vmul.f32 %v1153, %v1152
    %v1155 = vmul.f32 0.5, %v1154
    %v1156 = vsub.f32 1.5, %v1155
    %v1157 = vmul.f32 %v1152, %v1156
    %vm1158 = vweird.f32 %v1151
    %vm1159 = vweird.f32 %v1152
    %vm1160 = vmor %vm1158, %vm1159
    %v1161 = vsel %vm1160, %v1152, %v1157
    %v1162 = vmul.f32 %v1150, %v1161
    %v1163 = vmul.f32 %v1162, %v289
    %v1164 = vadd.f32 %v1163, %v294
    %v1165 = vpack.c.bf16 %v1164, %v1164
    %v1166 = vpack.c.bf16 %v1066, %v1066
    %1168 = vrot.lane.b32.xlu0 %v1166, 32
    %v1169 = vpop.permute.xlu0 %1168
    %v1171 = vsel %vm147, %v1169, 0
    %1173 = vmatpush.bf16.msra.mxu0 0
    %1174 = vmatpush.bf16.msra.mxu0 0
    %1175 = vmatpush.bf16.msra.mxu0 0
    %1176 = vmatpush.bf16.msra.mxu0 0
    %1177 = vmatpush.bf16.msra.mxu0 0
    %1178 = vmatpush.bf16.msra.mxu0 0
    %1179 = vmatpush.bf16.msra.mxu0 %v307
    %1180 = vmatpush.bf16.msra.mxu0 %v306
    %1181 = vmatmul.bf16.gmra.mxu0 %v1171
    %v1182 = vpop.f32.mrf.mxu0
    %v1183 = vadd.f32 0.0, %v1182
    %v1184 = vpop.f32.mrf.mxu0
    %1185 = vdwg.mxu0
    %1187 = vrot.lane.b32.xlu0 %v1165, 32
    %v1188 = vpop.permute.xlu0 %1187
    %v1190 = vsel %vm147, %v1188, 0
    %1192 = vmatpush.bf16.msra.mxu0 0
    %1193 = vmatpush.bf16.msra.mxu0 0
    %1194 = vmatpush.bf16.msra.mxu0 0
    %1195 = vmatpush.bf16.msra.mxu0 0
    %1196 = vmatpush.bf16.msra.mxu0 0
    %1197 = vmatpush.bf16.msra.mxu0 0
    %1198 = vmatpush.bf16.msra.mxu0 %v335
    %1199 = vmatpush.bf16.msra.mxu0 %v334
    %1200 = vmatmul.bf16.gmra.mxu0 %v1190
    %v1201 = vpop.f32.mrf.mxu0
    %v1202 = vadd.f32 %v1183, %v1201
    %v1203 = vpop.f32.mrf.mxu0
    %1204 = vdwg.mxu0
    %v1205 = vadd.f32 %v1202, %v177
    %v1206 = vxor.u32 %v1205, 2147483648
    %v1207 = vmul.f32 %v1206, 1.442695
    %v1208 = vpow.pop %v1207
    %v1209 = vadd.f32 %v1208, 1.0
    %v1210 = vrcp.pop %v1209
    %v1211 = vmul.f32 %v1209, %v1210
    %v1212 = vsub.f32 1.0, %v1211
    %v1213 = vmul.f32 %v1210, %v1212
    %v1214 = vadd.f32 %v1210, %v1213
    %vm1215 = vweird.f32 %v1209
    %vm1216 = vweird.f32 %v1210
    %vm1217 = vmor %vm1215, %vm1216
    %v1218 = vsel %vm1217, %v1210, %v1214
    %v1219 = vand.u32 2147483647, %v1209
    %vm1220 = vcmp.eq.f32.partialorder %v1219, 8.507059e+37
    %v1221 = vand.u32 %v1209, 2147483648
    %v1222 = vor.u32 1.1754944e-38, %v1221
    %v1223 = vsel %vm1220, %v1222, %v1218
    %v1224 = vmul.f32 1.0, %v1223
    %v1225 = vtanh.pop %v1205
    %v1226 = vmul.f32 %v1224, %v1025
    %1228 = vrot.lane.b32.xlu0 %v1225, 64
    %v1229 = vpop.permute.xlu0 %1228
    %v1231 = vmul.f32 %v1224, %v1229
    %1233 = vrot.lane.b32.xlu0 %v1231, 32
    %v1234 = vpop.permute.xlu0 %1233
    %v1236 = vadd.f32 %v1226, %v1234
    %v1237 = vtanh.pop %v1236
    %1239 = vrot.lane.b32.xlu0 %v1237, 64
    %v1240 = vpop.permute.xlu0 %1239
    %v1242 = vmul.f32 %v1224, %v1240
    %v1243 = vadd.f32 %v1242, %v1164
    %1245 = vrot.lane.b32.xlu0 %v1243, 32
    %v1246 = vpop.permute.xlu0 %1245
    %v1248 = vsel %vm147, %v1246, 0.0
    %1249 = vadd.xlane.f32.xlu0 %v1248
    %v1250 = vpop.xlane.xlu0 %1249
    %v1251 = vmul.f32 %v1243, %v1243
    %1253 = vrot.lane.b32.xlu0 %v1251, 32
    %v1254 = vpop.permute.xlu0 %1253
    %v1256 = vsel %vm147, %v1254, 0.0
    %1257 = vadd.xlane.f32.xlu0 %v1256
    %v1258 = vpop.xlane.xlu0 %1257
    %v1259 = vmul.f32 %v1250, 0.03125
    %v1260 = vmul.f32 %v1258, 0.03125
    %v1261 = vmul.f32 %v1259, %v1259
    %v1262 = vsub.f32 %v1260, %v1261
    %v1263 = vsub.f32 %v1243, %v1259
    %v1264 = vadd.f32 %v1262, 1e-05
    %v1265 = vrsqrt.pop %v1264
    %v1266 = vmul.f32 %v1265, %v1264
    %v1267 = vmul.f32 %v1266, %v1265
    %v1268 = vmul.f32 0.5, %v1267
    %v1269 = vsub.f32 1.5, %v1268
    %v1270 = vmul.f32 %v1265, %v1269
    %vm1271 = vweird.f32 %v1264
    %vm1272 = vweird.f32 %v1265
    %vm1273 = vmor %vm1271, %vm1272
    %v1274 = vsel %vm1273, %v1265, %v1270
    %v1275 = vmul.f32 %v1263, %v1274
    %v1276 = vmul.f32 %v1275, %v427
    %v1277 = vadd.f32 %v1276, %v432
    %1279 = vrot.lane.b32.xlu0 %v1277, 32
    %v1280 = vpop.permute.xlu0 %1279
    %s1282 = scalar_lea.vmem [#allocation3], 32
    %1283 = vst.msk [vmem:[%s1282] sm:$0xff] %vm147, %v1280
    %v1284 = vld [vmem:[#allocation2 + $0x50] sm:$0xff]
    %v1285 = vld [vmem:[#allocation2 + $0x58] sm:$0xff]
    %1286 = vmatpush.bf16.msra.mxu0 0
    %1287 = vmatpush.bf16.msra.mxu0 0
    %1288 = vmatpush.bf16.msra.mxu0 0
    %1289 = vmatpush.bf16.msra.mxu0 0
    %1290 = vmatpush.bf16.msra.mxu0 0
    %1291 = vmatpush.bf16.msra.mxu0 0
    %1292 = vmatpush.bf16.msra.mxu0 %v193
    %1293 = vmatpush.bf16.msra.mxu0 %v192
    %1294 = vmatmul.bf16.gmra.mxu0 %v1190
    %v1295 = vpop.f32.mrf.mxu0
    %v1296 = vadd.f32 0.0, %v1295
    %v1297 = vpop.f32.mrf.mxu0
    %1298 = vdwg.mxu0
    %v1299 = vadd.f32 %v1284, %v1296
    %v1300 = vxor.u32 %v1299, 2147483648
    %v1301 = vmul.f32 %v1300, 1.442695
    %v1302 = vpow.pop %v1301
    %v1303 = vadd.f32 %v1302, 1.0
    %v1304 = vrcp.pop %v1303
    %v1305 = vmul.f32 %v1303, %v1304
    %v1306 = vsub.f32 1.0, %v1305
    %v1307 = vmul.f32 %v1304, %v1306
    %v1308 = vadd.f32 %v1304, %v1307
    %vm1309 = vweird.f32 %v1303
    %vm1310 = vweird.f32 %v1304
    %vm1311 = vmor %vm1309, %vm1310
    %v1312 = vsel %vm1311, %v1304, %v1308
    %v1313 = vand.u32 2147483647, %v1303
    %vm1314 = vcmp.eq.f32.partialorder %v1313, 8.507059e+37
    %v1315 = vand.u32 %v1303, 2147483648
    %v1316 = vor.u32 1.1754944e-38, %v1315
    %v1317 = vsel %vm1314, %v1316, %v1312
    %v1318 = vmul.f32 1.0, %v1317
    %v1319 = vtanh.pop %v1299
    %v1320 = vmul.f32 %v1318, %v1119
    %1322 = vrot.lane.b32.xlu0 %v1319, 64
    %v1323 = vpop.permute.xlu0 %1322
    %v1325 = vmul.f32 %v1318, %v1323
    %1327 = vrot.lane.b32.xlu0 %v1325, 32
    %v1328 = vpop.permute.xlu0 %1327
    %v1330 = vadd.f32 %v1320, %v1328
    %v1331 = vtanh.pop %v1330
    %1333 = vrot.lane.b32.xlu0 %v1331, 64
    %v1334 = vpop.permute.xlu0 %1333
    %v1336 = vmul.f32 %v1318, %v1334
    %1338 = vrot.lane.b32.xlu0 %v1285, 96
    %v1339 = vpop.permute.xlu0 %1338
    %v1341 = vadd.f32 %v1336, %v1339
    %1343 = vrot.lane.b32.xlu0 %v1341, 32
    %v1344 = vpop.permute.xlu0 %1343
    %v1346 = vsel %vm147, %v1344, 0.0
    %1347 = vadd.xlane.f32.xlu0 %v1346
    %v1348 = vpop.xlane.xlu0 %1347
    %v1349 = vmul.f32 %v1341, %v1341
    %1351 = vrot.lane.b32.xlu0 %v1349, 32
    %v1352 = vpop.permute.xlu0 %1351
    %v1354 = vsel %vm147, %v1352, 0.0
    %1355 = vadd.xlane.f32.xlu0 %v1354
    %v1356 = vpop.xlane.xlu0 %1355
    %v1357 = vmul.f32 %v1348, 0.03125
    %v1358 = vmul.f32 %v1356, 0.03125
    %v1359 = vmul.f32 %v1357, %v1357
    %v1360 = vsub.f32 %v1358, %v1359
    %v1361 = vsub.f32 %v1341, %v1357
    %v1362 = vadd.f32 %v1360, 1e-05
    %v1363 = vrsqrt.pop %v1362
    %v1364 = vmul.f32 %v1363, %v1362
    %v1365 = vmul.f32 %v1364, %v1363
    %v1366 = vmul.f32 0.5, %v1365
    %v1367 = vsub.f32 1.5, %v1366
    %v1368 = vmul.f32 %v1363, %v1367
    %vm1369 = vweird.f32 %v1362
    %vm1370 = vweird.f32 %v1363
    %vm1371 = vmor %vm1369, %vm1370
    %v1372 = vsel %vm1371, %v1363, %v1368
    %v1373 = vmul.f32 %v1361, %v1372
    %v1374 = vmul.f32 %v1373, %v289
    %v1375 = vadd.f32 %v1374, %v294
    %v1376 = vpack.c.bf16 %v1375, %v1375
    %v1377 = vpack.c.bf16 %v1277, %v1277
    %1379 = vrot.lane.b32.xlu0 %v1377, 32
    %v1380 = vpop.permute.xlu0 %1379
    %v1382 = vsel %vm147, %v1380, 0
    %1384 = vmatpush.bf16.msra.mxu0 0
    %1385 = vmatpush.bf16.msra.mxu0 0
    %1386 = vmatpush.bf16.msra.mxu0 0
    %1387 = vmatpush.bf16.msra.mxu0 0
    %1388 = vmatpush.bf16.msra.mxu0 0
    %1389 = vmatpush.bf16.msra.mxu0 0
    %1390 = vmatpush.bf16.msra.mxu0 %v307
    %1391 = vmatpush.bf16.msra.mxu0 %v306
    %1392 = vmatmul.bf16.gmra.mxu0 %v1382
    %v1393 = vpop.f32.mrf.mxu0
    %v1394 = vadd.f32 0.0, %v1393
    %v1395 = vpop.f32.mrf.mxu0
    %1396 = vdwg.mxu0
    %1398 = vrot.lane.b32.xlu0 %v1376, 32
    %v1399 = vpop.permute.xlu0 %1398
    %v1401 = vsel %vm147, %v1399, 0
    %1403 = vmatpush.bf16.msra.mxu0 0
    %1404 = vmatpush.bf16.msra.mxu0 0
    %1405 = vmatpush.bf16.msra.mxu0 0
    %1406 = vmatpush.bf16.msra.mxu0 0
    %1407 = vmatpush.bf16.msra.mxu0 0
    %1408 = vmatpush.bf16.msra.mxu0 0
    %1409 = vmatpush.bf16.msra.mxu0 %v335
    %1410 = vmatpush.bf16.msra.mxu0 %v334
    %1411 = vmatmul.bf16.gmra.mxu0 %v1401
    %v1412 = vpop.f32.mrf.mxu0
    %v1413 = vadd.f32 %v1394, %v1412
    %v1414 = vpop.f32.mrf.mxu0
    %1415 = vdwg.mxu0
    %v1416 = vadd.f32 %v1413, %v177
    %v1417 = vxor.u32 %v1416, 2147483648
    %v1418 = vmul.f32 %v1417, 1.442695
    %v1419 = vpow.pop %v1418
    %v1420 = vadd.f32 %v1419, 1.0
    %v1421 = vrcp.pop %v1420
    %v1422 = vmul.f32 %v1420, %v1421
    %v1423 = vsub.f32 1.0, %v1422
    %v1424 = vmul.f32 %v1421, %v1423
    %v1425 = vadd.f32 %v1421, %v1424
    %vm1426 = vweird.f32 %v1420
    %vm1427 = vweird.f32 %v1421
    %vm1428 = vmor %vm1426, %vm1427
    %v1429 = vsel %vm1428, %v1421, %v1425
    %v1430 = vand.u32 2147483647, %v1420
    %vm1431 = vcmp.eq.f32.partialorder %v1430, 8.507059e+37
    %v1432 = vand.u32 %v1420, 2147483648
    %v1433 = vor.u32 1.1754944e-38, %v1432
    %v1434 = vsel %vm1431, %v1433, %v1429
    %v1435 = vmul.f32 1.0, %v1434
    %v1436 = vtanh.pop %v1416
    %v1437 = vmul.f32 %v1435, %v1236
    %1439 = vrot.lane.b32.xlu0 %v1436, 64
    %v1440 = vpop.permute.xlu0 %1439
    %v1442 = vmul.f32 %v1435, %v1440
    %1444 = vrot.lane.b32.xlu0 %v1442, 32
    %v1445 = vpop.permute.xlu0 %1444
    %v1447 = vadd.f32 %v1437, %v1445
    %v1448 = vtanh.pop %v1447
    %1450 = vrot.lane.b32.xlu0 %v1448, 64
    %v1451 = vpop.permute.xlu0 %1450
    %v1453 = vmul.f32 %v1435, %v1451
    %v1454 = vadd.f32 %v1453, %v1375
    %1456 = vrot.lane.b32.xlu0 %v1454, 32
    %v1457 = vpop.permute.xlu0 %1456
    %v1459 = vsel %vm147, %v1457, 0.0
    %1460 = vadd.xlane.f32.xlu0 %v1459
    %v1461 = vpop.xlane.xlu0 %1460
    %v1462 = vmul.f32 %v1454, %v1454
    %1464 = vrot.lane.b32.xlu0 %v1462, 32
    %v1465 = vpop.permute.xlu0 %1464
    %v1467 = vsel %vm147, %v1465, 0.0
    %1468 = vadd.xlane.f32.xlu0 %v1467
    %v1469 = vpop.xlane.xlu0 %1468
    %v1470 = vmul.f32 %v1461, 0.03125
    %v1471 = vmul.f32 %v1469, 0.03125
    %v1472 = vmul.f32 %v1470, %v1470
    %v1473 = vsub.f32 %v1471, %v1472
    %v1474 = vsub.f32 %v1454, %v1470
    %v1475 = vadd.f32 %v1473, 1e-05
    %v1476 = vrsqrt.pop %v1475
    %v1477 = vmul.f32 %v1476, %v1475
    %v1478 = vmul.f32 %v1477, %v1476
    %v1479 = vmul.f32 0.5, %v1478
    %v1480 = vsub.f32 1.5, %v1479
    %v1481 = vmul.f32 %v1476, %v1480
    %vm1482 = vweird.f32 %v1475
    %vm1483 = vweird.f32 %v1476
    %vm1484 = vmor %vm1482, %vm1483
    %v1485 = vsel %vm1484, %v1476, %v1481
    %v1486 = vmul.f32 %v1474, %v1485
    %v1487 = vmul.f32 %v1486, %v427
    %v1488 = vadd.f32 %v1487, %v432
    %1490 = vrot.lane.b32.xlu0 %v1488, 32
    %v1491 = vpop.permute.xlu0 %1490
    %s1493 = scalar_lea.vmem [#allocation3], 40
    %1494 = vst.msk [vmem:[%s1493] sm:$0xff] %vm147, %v1491
    %v1495 = vld [vmem:[#allocation2 + $0x60] sm:$0xff]
    %v1496 = vld [vmem:[#allocation2 + $0x68] sm:$0xff]
    %1497 = vmatpush.bf16.msra.mxu0 0
    %1498 = vmatpush.bf16.msra.mxu0 0
    %1499 = vmatpush.bf16.msra.mxu0 0
    %1500 = vmatpush.bf16.msra.mxu0 0
    %1501 = vmatpush.bf16.msra.mxu0 0
    %1502 = vmatpush.bf16.msra.mxu0 0
    %1503 = vmatpush.bf16.msra.mxu0 %v193
    %1504 = vmatpush.bf16.msra.mxu0 %v192
    %1505 = vmatmul.bf16.gmra.mxu0 %v1401
    %v1506 = vpop.f32.mrf.mxu0
    %v1507 = vadd.f32 0.0, %v1506
    %v1508 = vpop.f32.mrf.mxu0
    %1509 = vdwg.mxu0
    %v1510 = vadd.f32 %v1495, %v1507
    %v1511 = vxor.u32 %v1510, 2147483648
    %v1512 = vmul.f32 %v1511, 1.442695
    %v1513 = vpow.pop %v1512
    %v1514 = vadd.f32 %v1513, 1.0
    %v1515 = vrcp.pop %v1514
    %v1516 = vmul.f32 %v1514, %v1515
    %v1517 = vsub.f32 1.0, %v1516
    %v1518 = vmul.f32 %v1515, %v1517
    %v1519 = vadd.f32 %v1515, %v1518
    %vm1520 = vweird.f32 %v1514
    %vm1521 = vweird.f32 %v1515
    %vm1522 = vmor %vm1520, %vm1521
    %v1523 = vsel %vm1522, %v1515, %v1519
    %v1524 = vand.u32 2147483647, %v1514
    %vm1525 = vcmp.eq.f32.partialorder %v1524, 8.507059e+37
    %v1526 = vand.u32 %v1514, 2147483648
    %v1527 = vor.u32 1.1754944e-38, %v1526
    %v1528 = vsel %vm1525, %v1527, %v1523
    %v1529 = vmul.f32 1.0, %v1528
    %v1530 = vtanh.pop %v1510
    %v1531 = vmul.f32 %v1529, %v1330
    %1533 = vrot.lane.b32.xlu0 %v1530, 64
    %v1534 = vpop.permute.xlu0 %1533
    %v1536 = vmul.f32 %v1529, %v1534
    %1538 = vrot.lane.b32.xlu0 %v1536, 32
    %v1539 = vpop.permute.xlu0 %1538
    %v1541 = vadd.f32 %v1531, %v1539
    %v1542 = vtanh.pop %v1541
    %1544 = vrot.lane.b32.xlu0 %v1542, 64
    %v1545 = vpop.permute.xlu0 %1544
    %v1547 = vmul.f32 %v1529, %v1545
    %1549 = vrot.lane.b32.xlu0 %v1496, 96
    %v1550 = vpop.permute.xlu0 %1549
    %v1552 = vadd.f32 %v1547, %v1550
    %1554 = vrot.lane.b32.xlu0 %v1552, 32
    %v1555 = vpop.permute.xlu0 %1554
    %v1557 = vsel %vm147, %v1555, 0.0
    %1558 = vadd.xlane.f32.xlu0 %v1557
    %v1559 = vpop.xlane.xlu0 %1558
    %v1560 = vmul.f32 %v1552, %v1552
    %1562 = vrot.lane.b32.xlu0 %v1560, 32
    %v1563 = vpop.permute.xlu0 %1562
    %v1565 = vsel %vm147, %v1563, 0.0
    %1566 = vadd.xlane.f32.xlu0 %v1565
    %v1567 = vpop.xlane.xlu0 %1566
    %v1568 = vmul.f32 %v1559, 0.03125
    %v1569 = vmul.f32 %v1567, 0.03125
    %v1570 = vmul.f32 %v1568, %v1568
    %v1571 = vsub.f32 %v1569, %v1570
    %v1572 = vsub.f32 %v1552, %v1568
    %v1573 = vadd.f32 %v1571, 1e-05
    %v1574 = vrsqrt.pop %v1573
    %v1575 = vmul.f32 %v1574, %v1573
    %v1576 = vmul.f32 %v1575, %v1574
    %v1577 = vmul.f32 0.5, %v1576
    %v1578 = vsub.f32 1.5, %v1577
    %v1579 = vmul.f32 %v1574, %v1578
    %vm1580 = vweird.f32 %v1573
    %vm1581 = vweird.f32 %v1574
    %vm1582 = vmor %vm1580, %vm1581
    %v1583 = vsel %vm1582, %v1574, %v1579
    %v1584 = vmul.f32 %v1572, %v1583
    %v1585 = vmul.f32 %v1584, %v289
    %v1586 = vadd.f32 %v1585, %v294
    %v1587 = vpack.c.bf16 %v1586, %v1586
    %v1588 = vpack.c.bf16 %v1488, %v1488
    %1590 = vrot.lane.b32.xlu0 %v1588, 32
    %v1591 = vpop.permute.xlu0 %1590
    %v1593 = vsel %vm147, %v1591, 0
    %1595 = vmatpush.bf16.msra.mxu0 0
    %1596 = vmatpush.bf16.msra.mxu0 0
    %1597 = vmatpush.bf16.msra.mxu0 0
    %1598 = vmatpush.bf16.msra.mxu0 0
    %1599 = vmatpush.bf16.msra.mxu0 0
    %1600 = vmatpush.bf16.msra.mxu0 0
    %1601 = vmatpush.bf16.msra.mxu0 %v307
    %1602 = vmatpush.bf16.msra.mxu0 %v306
    %1603 = vmatmul.bf16.gmra.mxu0 %v1593
    %v1604 = vpop.f32.mrf.mxu0
    %v1605 = vadd.f32 0.0, %v1604
    %v1606 = vpop.f32.mrf.mxu0
    %1607 = vdwg.mxu0
    %1609 = vrot.lane.b32.xlu0 %v1587, 32
    %v1610 = vpop.permute.xlu0 %1609
    %v1612 = vsel %vm147, %v1610, 0
    %1614 = vmatpush.bf16.msra.mxu0 0
    %1615 = vmatpush.bf16.msra.mxu0 0
    %1616 = vmatpush.bf16.msra.mxu0 0
    %1617 = vmatpush.bf16.msra.mxu0 0
    %1618 = vmatpush.bf16.msra.mxu0 0
    %1619 = vmatpush.bf16.msra.mxu0 0
    %1620 = vmatpush.bf16.msra.mxu0 %v335
    %1621 = vmatpush.bf16.msra.mxu0 %v334
    %1622 = vmatmul.bf16.gmra.mxu0 %v1612
    %v1623 = vpop.f32.mrf.mxu0
    %v1624 = vadd.f32 %v1605, %v1623
    %v1625 = vpop.f32.mrf.mxu0
    %1626 = vdwg.mxu0
    %v1627 = vadd.f32 %v1624, %v177
    %v1628 = vxor.u32 %v1627, 2147483648
    %v1629 = vmul.f32 %v1628, 1.442695
    %v1630 = vpow.pop %v1629
    %v1631 = vadd.f32 %v1630, 1.0
    %v1632 = vrcp.pop %v1631
    %v1633 = vmul.f32 %v1631, %v1632
    %v1634 = vsub.f32 1.0, %v1633
    %v1635 = vmul.f32 %v1632, %v1634
    %v1636 = vadd.f32 %v1632, %v1635
    %vm1637 = vweird.f32 %v1631
    %vm1638 = vweird.f32 %v1632
    %vm1639 = vmor %vm1637, %vm1638
    %v1640 = vsel %vm1639, %v1632, %v1636
    %v1641 = vand.u32 2147483647, %v1631
    %vm1642 = vcmp.eq.f32.partialorder %v1641, 8.507059e+37
    %v1643 = vand.u32 %v1631, 2147483648
    %v1644 = vor.u32 1.1754944e-38, %v1643
    %v1645 = vsel %vm1642, %v1644, %v1640
    %v1646 = vmul.f32 1.0, %v1645
    %v1647 = vtanh.pop %v1627
    %v1648 = vmul.f32 %v1646, %v1447
    %1650 = vrot.lane.b32.xlu0 %v1647, 64
    %v1651 = vpop.permute.xlu0 %1650
    %v1653 = vmul.f32 %v1646, %v1651
    %1655 = vrot.lane.b32.xlu0 %v1653, 32
    %v1656 = vpop.permute.xlu0 %1655
    %v1658 = vadd.f32 %v1648, %v1656
    %v1659 = vtanh.pop %v1658
    %1661 = vrot.lane.b32.xlu0 %v1659, 64
    %v1662 = vpop.permute.xlu0 %1661
    %v1664 = vmul.f32 %v1646, %v1662
    %v1665 = vadd.f32 %v1664, %v1586
    %1667 = vrot.lane.b32.xlu0 %v1665, 32
    %v1668 = vpop.permute.xlu0 %1667
    %v1670 = vsel %vm147, %v1668, 0.0
    %1671 = vadd.xlane.f32.xlu0 %v1670
    %v1672 = vpop.xlane.xlu0 %1671
    %v1673 = vmul.f32 %v1665, %v1665
    %1675 = vrot.lane.b32.xlu0 %v1673, 32
    %v1676 = vpop.permute.xlu0 %1675
    %v1678 = vsel %vm147, %v1676, 0.0
    %1679 = vadd.xlane.f32.xlu0 %v1678
    %v1680 = vpop.xlane.xlu0 %1679
    %v1681 = vmul.f32 %v1672, 0.03125
    %v1682 = vmul.f32 %v1680, 0.03125
    %v1683 = vmul.f32 %v1681, %v1681
    %v1684 = vsub.f32 %v1682, %v1683
    %v1685 = vsub.f32 %v1665, %v1681
    %v1686 = vadd.f32 %v1684, 1e-05
    %v1687 = vrsqrt.pop %v1686
    %v1688 = vmul.f32 %v1687, %v1686
    %v1689 = vmul.f32 %v1688, %v1687
    %v1690 = vmul.f32 0.5, %v1689
    %v1691 = vsub.f32 1.5, %v1690
    %v1692 = vmul.f32 %v1687, %v1691
    %vm1693 = vweird.f32 %v1686
    %vm1694 = vweird.f32 %v1687
    %vm1695 = vmor %vm1693, %vm1694
    %v1696 = vsel %vm1695, %v1687, %v1692
    %v1697 = vmul.f32 %v1685, %v1696
    %v1698 = vmul.f32 %v1697, %v427
    %v1699 = vadd.f32 %v1698, %v432
    %1701 = vrot.lane.b32.xlu0 %v1699, 32
    %v1702 = vpop.permute.xlu0 %1701
    %s1704 = scalar_lea.vmem [#allocation3], 48
    %1705 = vst.msk [vmem:[%s1704] sm:$0xff] %vm147, %v1702
    %v1706 = vld [vmem:[#allocation2 + $0x70] sm:$0xff]
    %v1707 = vld [vmem:[#allocation2 + $0x78] sm:$0xff]
    %1708 = vmatpush.bf16.msra.mxu0 0
    %1709 = vmatpush.bf16.msra.mxu0 0
    %1710 = vmatpush.bf16.msra.mxu0 0
    %1711 = vmatpush.bf16.msra.mxu0 0
    %1712 = vmatpush.bf16.msra.mxu0 0
    %1713 = vmatpush.bf16.msra.mxu0 0
    %1714 = vmatpush.bf16.msra.mxu0 %v193
    %1715 = vmatpush.bf16.msra.mxu0 %v192
    %1716 = vmatmul.bf16.gmra.mxu0 %v1612
    %v1717 = vpop.f32.mrf.mxu0
    %v1718 = vadd.f32 0.0, %v1717
    %v1719 = vpop.f32.mrf.mxu0
    %1720 = vdwg.mxu0
    %v1721 = vadd.f32 %v1706, %v1718
    %v1722 = vxor.u32 %v1721, 2147483648
    %v1723 = vmul.f32 %v1722, 1.442695
    %v1724 = vpow.pop %v1723
    %v1725 = vadd.f32 %v1724, 1.0
    %v1726 = vrcp.pop %v1725
    %v1727 = vmul.f32 %v1725, %v1726
    %v1728 = vsub.f32 1.0, %v1727
    %v1729 = vmul.f32 %v1726, %v1728
    %v1730 = vadd.f32 %v1726, %v1729
    %vm1731 = vweird.f32 %v1725
    %vm1732 = vweird.f32 %v1726
    %vm1733 = vmor %vm1731, %vm1732
    %v1734 = vsel %vm1733, %v1726, %v1730
    %v1735 = vand.u32 2147483647, %v1725
    %vm1736 = vcmp.eq.f32.partialorder %v1735, 8.507059e+37
    %v1737 = vand.u32 %v1725, 2147483648
    %v1738 = vor.u32 1.1754944e-38, %v1737
    %v1739 = vsel %vm1736, %v1738, %v1734
    %v1740 = vmul.f32 1.0, %v1739
    %v1741 = vtanh.pop %v1721
    %v1742 = vmul.f32 %v1740, %v1541
    %1744 = vrot.lane.b32.xlu0 %v1741, 64
    %v1745 = vpop.permute.xlu0 %1744
    %v1747 = vmul.f32 %v1740, %v1745
    %1749 = vrot.lane.b32.xlu0 %v1747, 32
    %v1750 = vpop.permute.xlu0 %1749
    %v1752 = vadd.f32 %v1742, %v1750
    %v1753 = vtanh.pop %v1752
    %1755 = vrot.lane.b32.xlu0 %v1753, 64
    %v1756 = vpop.permute.xlu0 %1755
    %v1758 = vmul.f32 %v1740, %v1756
    %1760 = vrot.lane.b32.xlu0 %v1707, 96
    %v1761 = vpop.permute.xlu0 %1760
    %v1763 = vadd.f32 %v1758, %v1761
    %1765 = vrot.lane.b32.xlu0 %v1763, 32
    %v1766 = vpop.permute.xlu0 %1765
    %v1768 = vsel %vm147, %v1766, 0.0
    %1769 = vadd.xlane.f32.xlu0 %v1768
    %v1770 = vpop.xlane.xlu0 %1769
    %v1771 = vmul.f32 %v1763, %v1763
    %1773 = vrot.lane.b32.xlu0 %v1771, 32
    %v1774 = vpop.permute.xlu0 %1773
    %v1776 = vsel %vm147, %v1774, 0.0
    %1777 = vadd.xlane.f32.xlu0 %v1776
    %v1778 = vpop.xlane.xlu0 %1777
    %v1779 = vmul.f32 %v1770, 0.03125
    %v1780 = vmul.f32 %v1778, 0.03125
    %v1781 = vmul.f32 %v1779, %v1779
    %v1782 = vsub.f32 %v1780, %v1781
    %v1783 = vsub.f32 %v1763, %v1779
    %v1784 = vadd.f32 %v1782, 1e-05
    %v1785 = vrsqrt.pop %v1784
    %v1786 = vmul.f32 %v1785, %v1784
    %v1787 = vmul.f32 %v1786, %v1785
    %v1788 = vmul.f32 0.5, %v1787
    %v1789 = vsub.f32 1.5, %v1788
    %v1790 = vmul.f32 %v1785, %v1789
    %vm1791 = vweird.f32 %v1784
    %vm1792 = vweird.f32 %v1785
    %vm1793 = vmor %vm1791, %vm1792
    %v1794 = vsel %vm1793, %v1785, %v1790
    %v1795 = vmul.f32 %v1783, %v1794
    %v1796 = vmul.f32 %v1795, %v289
    %v1797 = vadd.f32 %v1796, %v294
    %v1798 = vpack.c.bf16 %v1797, %v1797
    %v1799 = vpack.c.bf16 %v1699, %v1699
    %1801 = vrot.lane.b32.xlu0 %v1799, 32
    %v1802 = vpop.permute.xlu0 %1801
    %v1804 = vsel %vm147, %v1802, 0
    %1806 = vmatpush.bf16.msra.mxu0 0
    %1807 = vmatpush.bf16.msra.mxu0 0
    %1808 = vmatpush.bf16.msra.mxu0 0
    %1809 = vmatpush.bf16.msra.mxu0 0
    %1810 = vmatpush.bf16.msra.mxu0 0
    %1811 = vmatpush.bf16.msra.mxu0 0
    %1812 = vmatpush.bf16.msra.mxu0 %v307
    %1813 = vmatpush.bf16.msra.mxu0 %v306
    %1814 = vmatmul.bf16.gmra.mxu0 %v1804
    %v1815 = vpop.f32.mrf.mxu0
    %v1816 = vadd.f32 0.0, %v1815
    %v1817 = vpop.f32.mrf.mxu0
    %1818 = vdwg.mxu0
    %1820 = vrot.lane.b32.xlu0 %v1798, 32
    %v1821 = vpop.permute.xlu0 %1820
    %v1823 = vsel %vm147, %v1821, 0
    %1825 = vmatpush.bf16.msra.mxu0 0
    %1826 = vmatpush.bf16.msra.mxu0 0
    %1827 = vmatpush.bf16.msra.mxu0 0
    %1828 = vmatpush.bf16.msra.mxu0 0
    %1829 = vmatpush.bf16.msra.mxu0 0
    %1830 = vmatpush.bf16.msra.mxu0 0
    %1831 = vmatpush.bf16.msra.mxu0 %v335
    %1832 = vmatpush.bf16.msra.mxu0 %v334
    %1833 = vmatmul.bf16.gmra.mxu0 %v1823
    %v1834 = vpop.f32.mrf.mxu0
    %v1835 = vadd.f32 %v1816, %v1834
    %v1836 = vpop.f32.mrf.mxu0
    %1837 = vdwg.mxu0
    %v1838 = vadd.f32 %v1835, %v177
    %v1839 = vxor.u32 %v1838, 2147483648
    %v1840 = vmul.f32 %v1839, 1.442695
    %v1841 = vpow.pop %v1840
    %v1842 = vadd.f32 %v1841, 1.0
    %v1843 = vrcp.pop %v1842
    %v1844 = vmul.f32 %v1842, %v1843
    %v1845 = vsub.f32 1.0, %v1844
    %v1846 = vmul.f32 %v1843, %v1845
    %v1847 = vadd.f32 %v1843, %v1846
    %vm1848 = vweird.f32 %v1842
    %vm1849 = vweird.f32 %v1843
    %vm1850 = vmor %vm1848, %vm1849
    %v1851 = vsel %vm1850, %v1843, %v1847
    %v1852 = vand.u32 2147483647, %v1842
    %vm1853 = vcmp.eq.f32.partialorder %v1852, 8.507059e+37
    %v1854 = vand.u32 %v1842, 2147483648
    %v1855 = vor.u32 1.1754944e-38, %v1854
    %v1856 = vsel %vm1853, %v1855, %v1851
    %v1857 = vmul.f32 1.0, %v1856
    %v1858 = vtanh.pop %v1838
    %v1859 = vmul.f32 %v1857, %v1658
    %1861 = vrot.lane.b32.xlu0 %v1858, 64
    %v1862 = vpop.permute.xlu0 %1861
    %v1864 = vmul.f32 %v1857, %v1862
    %1866 = vrot.lane.b32.xlu0 %v1864, 32
    %v1867 = vpop.permute.xlu0 %1866
    %v1869 = vadd.f32 %v1859, %v1867
    %v1870 = vtanh.pop %v1869
    %1872 = vrot.lane.b32.xlu0 %v1870, 64
    %v1873 = vpop.permute.xlu0 %1872
    %v1875 = vmul.f32 %v1857, %v1873
    %v1876 = vadd.f32 %v1875, %v1797
    %1878 = vrot.lane.b32.xlu0 %v1876, 32
    %v1879 = vpop.permute.xlu0 %1878
    %v1881 = vsel %vm147, %v1879, 0.0
    %1882 = vadd.xlane.f32.xlu0 %v1881
    %v1883 = vpop.xlane.xlu0 %1882
    %v1884 = vmul.f32 %v1876, %v1876
    %1886 = vrot.lane.b32.xlu0 %v1884, 32
    %v1887 = vpop.permute.xlu0 %1886
    %v1889 = vsel %vm147, %v1887, 0.0
    %1890 = vadd.xlane.f32.xlu0 %v1889
    %v1891 = vpop.xlane.xlu0 %1890
    %v1892 = vmul.f32 %v1883, 0.03125
    %v1893 = vmul.f32 %v1891, 0.03125
    %v1894 = vmul.f32 %v1892, %v1892
    %v1895 = vsub.f32 %v1893, %v1894
    %v1896 = vsub.f32 %v1876, %v1892
    %v1897 = vadd.f32 %v1895, 1e-05
    %v1898 = vrsqrt.pop %v1897
    %v1899 = vmul.f32 %v1898, %v1897
    %v1900 = vmul.f32 %v1899, %v1898
    %v1901 = vmul.f32 0.5, %v1900
    %v1902 = vsub.f32 1.5, %v1901
    %v1903 = vmul.f32 %v1898, %v1902
    %vm1904 = vweird.f32 %v1897
    %vm1905 = vweird.f32 %v1898
    %vm1906 = vmor %vm1904, %vm1905
    %v1907 = vsel %vm1906, %v1898, %v1903
    %v1908 = vmul.f32 %v1896, %v1907
    %v1909 = vmul.f32 %v1908, %v427
    %v1910 = vadd.f32 %v1909, %v432
    %1912 = vrot.lane.b32.xlu0 %v1910, 32
    %v1913 = vpop.permute.xlu0 %1912
    %s1915 = scalar_lea.vmem [#allocation3], 56
    %1916 = vst.msk [vmem:[%s1915] sm:$0xff] %vm147, %v1913
    %1918 = vrot.lane.b32.xlu0 %v1797, 32
    %v1919 = vpop.permute.xlu0 %1918
    %1921 = vst.msk [vmem:[#allocation5] sm:$0xff] %vm147, %v1919
    %s1922 = scalar_lea.vmem [#allocation5], 8
    %1923 = vst.msk [vmem:[%s1922] sm:$0xff] %vm147, %v1913
    %1925 = vrot.lane.b32.xlu0 %v1752, 96
    %v1926 = vpop.permute.xlu0 %1925
    %1928 = vst.msk [vmem:[#allocation7] sm:$0xff] %vm147, %v1926
    %1930 = vrot.lane.b32.xlu0 %v1869, 96
    %v1931 = vpop.permute.xlu0 %1930
    %s1933 = scalar_lea.vmem [#allocation7], 8
    %1934 = vst.msk [vmem:[%s1933] sm:$0xff] %vm147, %v1931
    // Predicated region
    $region18: #{slstm_layer_forward.1} parent=1 // pred_check
      _
    $region19: #{slstm_layer_forward.1} parent=1 // pred_check_branch
      %1936 = sbr.rel (0) target = $region21
    $region20: #{slstm_layer_forward.1} parent=1 // pred_region
      %1938 = vsyncadd [#allocation4], 0
      %s1939 = sshll.u32 [#allocation3], 4
      %s1940 = int_to_ptr.vmem [resolvable:$true] %s1939
      %s1941 = sshll.u32 %s4, 4
      %s1942 = int_to_ptr.hbm [resolvable:$true] %s1941
      %1947 = dma.vmem_to_hbm [thread:$0]  %s1940, 1024, %s1942, [#allocation4], 128, 128, 8
    $region21: #{slstm_layer_forward.1} parent=1 // pred_fallthru
      _
    // Predicated region
    $region22: #{slstm_layer_forward.1} parent=1 // pred_check
      _
    $region23: #{slstm_layer_forward.1} parent=1 // pred_check_branch
      %1949 = sbr.rel (0) target = $region25
    $region24: #{slstm_layer_forward.1} parent=1 // pred_region
      %1951 = vsyncadd [#allocation6], 0
      %s1952 = sshll.u32 [#allocation5], 4
      %s1953 = int_to_ptr.vmem [resolvable:$true] %s1952
      %s1954 = sshll.u32 %s5, 4
      %s1955 = int_to_ptr.hbm [resolvable:$true] %s1954
      %1960 = dma.vmem_to_hbm [thread:$0]  %s1953, 256, %s1955, [#allocation6], 128, 128, 8
    $region25: #{slstm_layer_forward.1} parent=1 // pred_fallthru
      _
    // Predicated region
    $region26: #{slstm_layer_forward.1} parent=1 // pred_check
      _
    $region27: #{slstm_layer_forward.1} parent=1 // pred_check_branch
      %1962 = sbr.rel (0) target = $region29
    $region28: #{slstm_layer_forward.1} parent=1 // pred_region
      %1964 = vsyncadd [#allocation6], 0
      %s1965 = sshll.u32 [#allocation7], 4
      %s1966 = int_to_ptr.vmem [resolvable:$true] %s1965
      %s1967 = sshll.u32 %s6, 4
      %s1968 = int_to_ptr.hbm [resolvable:$true] %s1967
      %1973 = dma.vmem_to_hbm [thread:$0]  %s1966, 256, %s1968, [#allocation6], 128, 128, 8
    $region29: #{slstm_layer_forward.1} parent=1 // pred_fallthru
      _
    // Predicated region
    $region30: #{slstm_layer_forward.1} parent=1 // pred_check
      _
    $region31: #{slstm_layer_forward.1} parent=1 // pred_check_branch
      %1975 = sbr.rel (0) target = $region33
    $region32: #{slstm_layer_forward.1} parent=1 // pred_region
      %1977 = dma.done [#allocation4], 1024
    $region33: #{slstm_layer_forward.1} parent=1 // pred_fallthru
      _
    // Predicated region
    $region34: #{slstm_layer_forward.1} parent=1 // pred_check
      _
    $region35: #{slstm_layer_forward.1} parent=1 // pred_check_branch
      %1979 = sbr.rel (0) target = $region37
    $region36: #{slstm_layer_forward.1} parent=1 // pred_region
      %1981 = dma.done [#allocation6], 256
    $region37: #{slstm_layer_forward.1} parent=1 // pred_fallthru
      _
    // Predicated region
    $region38: #{slstm_layer_forward.1} parent=1 // pred_check
      _
    $region39: #{slstm_layer_forward.1} parent=1 // pred_check_branch
      %1983 = sbr.rel (0) target = $region41
    $region40: #{slstm_layer_forward.1} parent=1 // pred_region
      %1985 = dma.done [#allocation6], 256
    $region41: #{slstm_layer_forward.1} parent=1 // pred_fallthru
      _
    %1986 = vsyncpa [#allocation4], 1
    %1987 = vsyncpa [#allocation6], 1

</llo_original>
